<compile_context>
chip_gen: v6e
topology: v6e:2x2x1
jax: 0.10.0
libtpu: 0.0.40
codegen_flags: <defaults>
</compile_context>

<pallas_src>
import math
import numpy as np
import jax
import jax.numpy as jnp
from jax.experimental import pallas as pl
from jax.experimental.pallas import tpu as pltpu

NHEAD = 8
LN_EPS = 1e-5
SC_PAD = 128          # lane-dense padding for the 2-wide scorer output
NEG_INF = -1e30       # additive mask value (pre-row-max) for cross-batch keys


# ------------------------------ Pallas kernel -------------------------------
def _sim_transformer_kernel(
    x_ref,        # (R, F)         R = B_TILE*S flattened rows of this block
    rep_ref,      # (H*R, R)       q replication matrix (constant)
    hmask_ref,    # (H*R, Dm)      per-head column mask (constant)
    bmask_ref,    # (H*R, R)       0 / -1e30 cross-batch additive mask (constant)
    sel_ref,      # (R, H*R)       head-block merge matrix (constant)
    w_emb_ref,    # (F, Dm)
    b_emb_ref,    # (1, Dm)
    wq_ref,       # (Dm, Dm)       1/sqrt(hd) folded in
    bq_ref,       # (1, Dm)
    wk_ref,       # (Dm, Dm)
    bk_ref,       # (1, Dm)
    wv_ref,       # (Dm, Dm)
    bv_ref,       # (1, Dm)
    wo_ref,       # (Dm, Dm)       attention output projection
    bo_ref,       # (1, Dm)
    ln1_g_ref,    # (1, Dm)
    ln1_b_ref,    # (1, Dm)
    w1_ref,       # (Dm, Dff)
    b1_ref,       # (1, Dff)
    w2_ref,       # (Dff, Dm)
    b2_ref,       # (1, Dm)
    ln2_g_ref,    # (1, Dm)
    ln2_b_ref,    # (1, Dm)
    ws_ref,       # (Dm, SC_PAD)   zero-padded scorer weights
    bs_ref,       # (1, SC_PAD)
    o_ref,        # (R, SC_PAD)
):
    def layernorm(h, g, b):
        mu = jnp.mean(h, axis=-1, keepdims=True)
        var = jnp.mean((h - mu) ** 2, axis=-1, keepdims=True)
        return (h - mu) * jax.lax.rsqrt(var + LN_EPS) * g + b

    x = x_ref[...]
    hmask = hmask_ref[...]

    # ---- embedder (+ dropout_1 == identity in eval mode) ----
    h = jnp.dot(x, w_emb_ref[...], preferred_element_type=jnp.float32) + b_emb_ref[...]

    # ---- q/k/v projections (full-width matmuls over the whole batch tile) ----
    q = jnp.dot(h, wq_ref[...], preferred_element_type=jnp.float32) + bq_ref[...]
    k = jnp.dot(h, wk_ref[...], preferred_element_type=jnp.float32) + bk_ref[...]
    v = jnp.dot(h, wv_ref[...], preferred_element_type=jnp.float32) + bv_ref[...]

    # ---- all heads, all B_TILE batch elements in one shot ------------------
    # q_stack[h*R + r, :] = q[r, :] masked to head h's dims.
    q_stack = jnp.dot(rep_ref[...], q, preferred_element_type=jnp.float32) * hmask

    # scores[h*R + r, r'] = <q[r], k[r']> over head h's dims; every batch
    # element's keys live on the lane axis.  Cross-batch entries are pushed to
    # -inf BEFORE the row max so softmax never leaks across batch elements.
    scores = jax.lax.dot_general(q_stack, k, (((1,), (1,)), ((), ())),
                                 preferred_element_type=jnp.float32)    # (H*R, R)
    scores = scores + bmask_ref[...]
    scores = scores - jnp.max(scores, axis=-1, keepdims=True)
    p = jnp.exp(scores)
    p = p * pl.reciprocal(jnp.sum(p, axis=-1, keepdims=True))   # exact (approx=False)

    # context for all heads; zero out other heads' columns, then merge blocks.
    pv = jnp.dot(p, v, preferred_element_type=jnp.float32) * hmask      # (H*R, Dm)
    attn = jnp.dot(sel_ref[...], pv, preferred_element_type=jnp.float32)  # (R, Dm)
    attn = jnp.dot(attn, wo_ref[...], preferred_element_type=jnp.float32) + bo_ref[...]

    # ---- residual + norm1 (attention dropout == identity) ----
    h = layernorm(h + attn, ln1_g_ref[...], ln1_b_ref[...])

    # ---- feed-forward (relu) ----
    ff = jnp.dot(h, w1_ref[...], preferred_element_type=jnp.float32) + b1_ref[...]
    ff = jnp.maximum(ff, 0.0)
    ff = jnp.dot(ff, w2_ref[...], preferred_element_type=jnp.float32) + b2_ref[...]

    # ---- residual + norm2 (ff dropout == identity) ----
    h = layernorm(h + ff, ln2_g_ref[...], ln2_b_ref[...])

    # ---- dropout_2 == identity, scorer (128-lane padded -> dense vst) ----
    o_ref[...] = jnp.dot(h, ws_ref[...], preferred_element_type=jnp.float32) + bs_ref[...]


# ------------------------- one-time parameter prep ----------------------------
def prepare_params(params, S, B_TILE):
    """Split/fold/pad weights and build grid-invariant routing constants once."""
    Dm = params["w_emb"].shape[1]
    hd = Dm // NHEAD
    scale = 1.0 / math.sqrt(hd)
    R = B_TILE * S

    in_w = np.asarray(params["in_w"], np.float32)
    in_b = np.asarray(params["in_b"], np.float32)
    wq = jnp.asarray(in_w[:, :Dm] * scale)
    wk = jnp.asarray(in_w[:, Dm:2 * Dm])
    wv = jnp.asarray(in_w[:, 2 * Dm:])
    bq = jnp.asarray(in_b[:, :Dm] * scale)
    bk = jnp.asarray(in_b[:, Dm:2 * Dm])
    bv = jnp.asarray(in_b[:, 2 * Dm:])

    sc_w = np.asarray(params["sc_w"], np.float32)
    sc_b = np.asarray(params["sc_b"], np.float32)
    n_out = sc_w.shape[1]
    ws_pad = np.zeros((Dm, SC_PAD), np.float32)
    ws_pad[:, :n_out] = sc_w
    bs_pad = np.zeros((1, SC_PAD), np.float32)
    bs_pad[:, :n_out] = sc_b

    # Grid-invariant routing constants (built on host, passed as resident inputs).
    jr = np.arange(NHEAD * R)
    r = np.arange(R)
    d = np.arange(Dm)
    rep = (jr[:, None] % R == r[None, :]).astype(np.float32)                 # (H*R, R)
    head_mask = ((jr // R)[:, None] == (d // hd)[None, :]).astype(np.float32)  # (H*R, Dm)
    bmask = np.where(((jr % R) // S)[:, None] == (r // S)[None, :],
                     np.float32(0.0), np.float32(NEG_INF))                   # (H*R, R)
    sel = (jr[None, :] % R == r[:, None]).astype(np.float32)                 # (R, H*R)

    consts = tuple(jnp.asarray(a) for a in (rep, head_mask, bmask, sel))
    weights = (
        jnp.asarray(params["w_emb"]), jnp.asarray(params["b_emb"]),
        wq, bq, wk, bk, wv, bv,
        jnp.asarray(params["out_w"]), jnp.asarray(params["out_b"]),
        jnp.asarray(params["ln1_g"]), jnp.asarray(params["ln1_b"]),
        jnp.asarray(params["lin1_w"]), jnp.asarray(params["lin1_b"]),
        jnp.asarray(params["lin2_w"]), jnp.asarray(params["lin2_b"]),
        jnp.asarray(params["ln2_g"]), jnp.asarray(params["ln2_b"]),
        jnp.asarray(ws_pad), jnp.asarray(bs_pad),
    )
    return {"b_tile": B_TILE, "seq": S, "n_out": n_out,
            "consts": consts, "weights": weights}


# -------------------------------- wrapper ------------------------------------
def sim_transformer_forward(x, prep):
    B, S, F = x.shape
    B_TILE = prep["b_tile"]
    assert S == prep["seq"]

    n_blocks = pl.cdiv(B, B_TILE)
    B_pad = n_blocks * B_TILE
    if B_pad != B:
        x = jnp.pad(x, ((0, B_pad - B), (0, 0), (0, 0)))
    R = B_TILE * S
    x_flat = x.reshape(B_pad * S, F)

    args = (x_flat,) + prep["consts"] + prep["weights"]

    def resident(a):   # full-array block, constant block index -> stays in VMEM
        return pl.BlockSpec(a.shape, lambda i: (0,) * a.ndim)

    in_specs = ([pl.BlockSpec((R, F), lambda i: (i, 0))]
                + [resident(a) for a in args[1:]])

    out_padded = pl.pallas_call(
        _sim_transformer_kernel,
        out_shape=jax.ShapeDtypeStruct((B_pad * S, SC_PAD), jnp.float32),
        grid=(n_blocks,),
        in_specs=in_specs,
        out_specs=pl.BlockSpec((R, SC_PAD), lambda i: (i, 0)),
        compiler_params=pltpu.CompilerParams(
            dimension_semantics=("parallel",),
            vmem_limit_bytes=32 * 1024 * 1024),
    )(*args)

    out = out_padded.reshape(B_pad, S, SC_PAD)[:B, :, :prep["n_out"]]
    return out


# -------------------------- pure-JAX reference --------------------------------
def sim_transformer_ref(x, p):
    B, S, _ = x.shape
    Dm = p["w_emb"].shape[1]
    hd = Dm // NHEAD

    def ln(h, g, b):
        mu = jnp.mean(h, axis=-1, keepdims=True)
        var = jnp.mean((h - mu) ** 2, axis=-1, keepdims=True)
        return (h - mu) / jnp.sqrt(var + LN_EPS) * g + b

    h = x @ p["w_emb"] + p["b_emb"]                                  # (B,S,Dm)
    qkv = h @ p["in_w"] + p["in_b"]                                  # (B,S,3Dm)
    q, k, v = jnp.split(qkv, 3, axis=-1)
    q = q.reshape(B, S, NHEAD, hd).transpose(0, 2, 1, 3)
    k = k.reshape(B, S, NHEAD, hd).transpose(0, 2, 1, 3)
    v = v.reshape(B, S, NHEAD, hd).transpose(0, 2, 1, 3)
    s = jnp.einsum("bhqd,bhkd->bhqk", q, k) / jnp.sqrt(float(hd))
    pw = jax.nn.softmax(s, axis=-1)
    a = jnp.einsum("bhqk,bhkd->bhqd", pw, v).transpose(0, 2, 1, 3).reshape(B, S, Dm)
    a = a @ p["out_w"] + p["out_b"]
    h = ln(h + a, p["ln1_g"], p["ln1_b"])
    ff = jnp.maximum(h @ p["lin1_w"] + p["lin1_b"], 0.0) @ p["lin2_w"] + p["lin2_b"]
    h = ln(h + ff, p["ln2_g"], p["ln2_b"])
    return h @ p["sc_w"] + p["sc_b"]


# -------------------------- deterministic params -------------------------------
def make_params(key, in_features, d_model, d_ff=256):
    ks = jax.random.split(key, 10)

    def u(k, shape, fan_in):
        lim = 1.0 / (fan_in ** 0.5)
        return jax.random.uniform(k, shape, jnp.float32, -lim, lim)

    return {
        # embedder: Linear(in_features, d_model)  (stored transposed: (in, out))
        "w_emb": u(ks[0], (in_features, d_model), in_features),
        "b_emb": u(ks[1], (1, d_model), in_features),
        # self-attention in-projection (3*d_model) and out-projection
        "in_w": u(ks[2], (d_model, 3 * d_model), d_model),
        "in_b": jnp.zeros((1, 3 * d_model), jnp.float32),
        "out_w": u(ks[3], (d_model, d_model), d_model),
        "out_b": jnp.zeros((1, d_model), jnp.float32),
        # layer norms
        "ln1_g": jnp.ones((1, d_model), jnp.float32),
        "ln1_b": jnp.zeros((1, d_model), jnp.float32),
        "ln2_g": jnp.ones((1, d_model), jnp.float32),
        "ln2_b": jnp.zeros((1, d_model), jnp.float32),
        # feed-forward
        "lin1_w": u(ks[4], (d_model, d_ff), d_model),
        "lin1_b": u(ks[5], (1, d_ff), d_model),
        "lin2_w": u(ks[6], (d_ff, d_model), d_ff),
        "lin2_b": u(ks[7], (1, d_model), d_ff),
        # scorer: Linear(d_model, 2)
        "sc_w": u(ks[8], (d_model, 2), d_model),
        "sc_b": u(ks[9], (1, 2), d_model),
    }


if __name__ == "__main__":
    B, S, IN_FEATURES, D_MODEL = 2, 8, 16, 32
    key = jax.random.PRNGKey(0)
    kx, kp = jax.random.split(key)
    x = jax.random.normal(kx, (B, S, IN_FEATURES), jnp.float32)
    params = make_params(kp, IN_FEATURES, D_MODEL)

    # Batch tile sized so B_TILE*S approaches 128 sublanes (capped at B here).
    B_TILE = max(1, min(B, 128 // S))
    prep = prepare_params(params, S, B_TILE)

    out = jax.block_until_ready(sim_transformer_forward(x, prep))
    ref = jax.block_until_ready(sim_transformer_ref(x, params))

    assert out.shape == (B, S, 2), out.shape
    assert jnp.allclose(out, ref, atol=1e-4, rtol=1e-4), (
        float(jnp.max(jnp.abs(out - ref))))
    print("KERNEL_OK")
</pallas_src>

<mosaic_0001>
module attributes {stable_mosaic.version = 11 : i64} {
  func.func @_sim_transformer_kernel(%arg0: i32, %arg1: memref<16x16xf32, #tpu.memory_space<vmem>>, %arg2: memref<128x16xf32, #tpu.memory_space<vmem>>, %arg3: memref<128x32xf32, #tpu.memory_space<vmem>>, %arg4: memref<128x16xf32, #tpu.memory_space<vmem>>, %arg5: memref<16x128xf32, #tpu.memory_space<vmem>>, %arg6: memref<16x32xf32, #tpu.memory_space<vmem>>, %arg7: memref<1x32xf32, #tpu.memory_space<vmem>>, %arg8: memref<32x32xf32, #tpu.memory_space<vmem>>, %arg9: memref<1x32xf32, #tpu.memory_space<vmem>>, %arg10: memref<32x32xf32, #tpu.memory_space<vmem>>, %arg11: memref<1x32xf32, #tpu.memory_space<vmem>>, %arg12: memref<32x32xf32, #tpu.memory_space<vmem>>, %arg13: memref<1x32xf32, #tpu.memory_space<vmem>>, %arg14: memref<32x32xf32, #tpu.memory_space<vmem>>, %arg15: memref<1x32xf32, #tpu.memory_space<vmem>>, %arg16: memref<1x32xf32, #tpu.memory_space<vmem>>, %arg17: memref<1x32xf32, #tpu.memory_space<vmem>>, %arg18: memref<32x256xf32, #tpu.memory_space<vmem>>, %arg19: memref<1x256xf32, #tpu.memory_space<vmem>>, %arg20: memref<256x32xf32, #tpu.memory_space<vmem>>, %arg21: memref<1x32xf32, #tpu.memory_space<vmem>>, %arg22: memref<1x32xf32, #tpu.memory_space<vmem>>, %arg23: memref<1x32xf32, #tpu.memory_space<vmem>>, %arg24: memref<32x128xf32, #tpu.memory_space<vmem>>, %arg25: memref<1x128xf32, #tpu.memory_space<vmem>>, %arg26: memref<16x128xf32, #tpu.memory_space<vmem>>) attributes {dimension_semantics = [#tpu.dimension_semantics<parallel>], iteration_bounds = array<i64: 1>, scalar_prefetch = 0 : i64, scratch_operands = 0 : i64, tpu.core_type = #tpu.core_type<tc>, window_params = [{transform_indices = @transform_0, window_bounds = array<i64: 16, 16>}, {pipeline_mode = #tpu.pipeline_mode<synchronous>, transform_indices = @transform_1, window_bounds = array<i64: 128, 16>}, {pipeline_mode = #tpu.pipeline_mode<synchronous>, transform_indices = @transform_2, window_bounds = array<i64: 128, 32>}, {pipeline_mode = #tpu.pipeline_mode<synchronous>, transform_indices = @transform_3, window_bounds = array<i64: 128, 16>}, {pipeline_mode = #tpu.pipeline_mode<synchronous>, transform_indices = @transform_4, window_bounds = array<i64: 16, 128>}, {pipeline_mode = #tpu.pipeline_mode<synchronous>, transform_indices = @transform_5, window_bounds = array<i64: 16, 32>}, {pipeline_mode = #tpu.pipeline_mode<synchronous>, transform_indices = @transform_6, window_bounds = array<i64: 1, 32>}, {pipeline_mode = #tpu.pipeline_mode<synchronous>, transform_indices = @transform_7, window_bounds = array<i64: 32, 32>}, {pipeline_mode = #tpu.pipeline_mode<synchronous>, transform_indices = @transform_8, window_bounds = array<i64: 1, 32>}, {pipeline_mode = #tpu.pipeline_mode<synchronous>, transform_indices = @transform_9, window_bounds = array<i64: 32, 32>}, {pipeline_mode = #tpu.pipeline_mode<synchronous>, transform_indices = @transform_10, window_bounds = array<i64: 1, 32>}, {pipeline_mode = #tpu.pipeline_mode<synchronous>, transform_indices = @transform_11, window_bounds = array<i64: 32, 32>}, {pipeline_mode = #tpu.pipeline_mode<synchronous>, transform_indices = @transform_12, window_bounds = array<i64: 1, 32>}, {pipeline_mode = #tpu.pipeline_mode<synchronous>, transform_indices = @transform_13, window_bounds = array<i64: 32, 32>}, {pipeline_mode = #tpu.pipeline_mode<synchronous>, transform_indices = @transform_14, window_bounds = array<i64: 1, 32>}, {pipeline_mode = #tpu.pipeline_mode<synchronous>, transform_indices = @transform_15, window_bounds = array<i64: 1, 32>}, {pipeline_mode = #tpu.pipeline_mode<synchronous>, transform_indices = @transform_16, window_bounds = array<i64: 1, 32>}, {pipeline_mode = #tpu.pipeline_mode<synchronous>, transform_indices = @transform_17, window_bounds = array<i64: 32, 256>}, {pipeline_mode = #tpu.pipeline_mode<synchronous>, transform_indices = @transform_18, window_bounds = array<i64: 1, 256>}, {pipeline_mode = #tpu.pipeline_mode<synchronous>, transform_indices = @transform_19, window_bounds = array<i64: 256, 32>}, {pipeline_mode = #tpu.pipeline_mode<synchronous>, transform_indices = @transform_20, window_bounds = array<i64: 1, 32>}, {pipeline_mode = #tpu.pipeline_mode<synchronous>, transform_indices = @transform_21, window_bounds = array<i64: 1, 32>}, {pipeline_mode = #tpu.pipeline_mode<synchronous>, transform_indices = @transform_22, window_bounds = array<i64: 1, 32>}, {pipeline_mode = #tpu.pipeline_mode<synchronous>, transform_indices = @transform_23, window_bounds = array<i64: 32, 128>}, {pipeline_mode = #tpu.pipeline_mode<synchronous>, transform_indices = @transform_24, window_bounds = array<i64: 1, 128>}, {transform_indices = @transform_25, window_bounds = array<i64: 16, 128>}]} {
    %c0 = arith.constant 0 : index
    %c0_0 = arith.constant 0 : index
    %0 = vector.load %arg1[%c0, %c0_0] : memref<16x16xf32, #tpu.memory_space<vmem>>, vector<16x16xf32>
    %c0_1 = arith.constant 0 : index
    %c0_2 = arith.constant 0 : index
    %1 = vector.load %arg3[%c0_1, %c0_2] : memref<128x32xf32, #tpu.memory_space<vmem>>, vector<128x32xf32>
    %c0_3 = arith.constant 0 : index
    %c0_4 = arith.constant 0 : index
    %2 = vector.load %arg6[%c0_3, %c0_4] : memref<16x32xf32, #tpu.memory_space<vmem>>, vector<16x32xf32>
    %cst = arith.constant dense<0.000000e+00> : vector<16x32xf32>
    %3 = tpu.matmul %0, %2, %cst {dimension_numbers = #tpu.dot_dimension_numbers<[1], [0], [0], [1], [0, 0, 1, 1], [], []>} : vector<16x16xf32>, vector<16x32xf32>, vector<16x32xf32> -> vector<16x32xf32>
    %c0_5 = arith.constant 0 : index
    %c0_6 = arith.constant 0 : index
    %4 = vector.load %arg7[%c0_5, %c0_6] : memref<1x32xf32, #tpu.memory_space<vmem>>, vector<1x32xf32>
    %5 = vector.broadcast %4 : vector<1x32xf32> to vector<16x32xf32>
    %6 = arith.addf %3, %5 : vector<16x32xf32>
    %c0_7 = arith.constant 0 : index
    %c0_8 = arith.constant 0 : index
    %7 = vector.load %arg8[%c0_7, %c0_8] : memref<32x32xf32, #tpu.memory_space<vmem>>, vector<32x32xf32>
    %cst_9 = arith.constant dense<0.000000e+00> : vector<16x32xf32>
    %8 = tpu.matmul %6, %7, %cst_9 {dimension_numbers = #tpu.dot_dimension_numbers<[1], [0], [0], [1], [0, 0, 1, 1], [], []>} : vector<16x32xf32>, vector<32x32xf32>, vector<16x32xf32> -> vector<16x32xf32>
    %c0_10 = arith.constant 0 : index
    %c0_11 = arith.constant 0 : index
    %9 = vector.load %arg9[%c0_10, %c0_11] : memref<1x32xf32, #tpu.memory_space<vmem>>, vector<1x32xf32>
    %10 = vector.broadcast %9 : vector<1x32xf32> to vector<16x32xf32>
    %11 = arith.addf %8, %10 : vector<16x32xf32>
    %c0_12 = arith.constant 0 : index
    %c0_13 = arith.constant 0 : index
    %12 = vector.load %arg10[%c0_12, %c0_13] : memref<32x32xf32, #tpu.memory_space<vmem>>, vector<32x32xf32>
    %cst_14 = arith.constant dense<0.000000e+00> : vector<16x32xf32>
    %13 = tpu.matmul %6, %12, %cst_14 {dimension_numbers = #tpu.dot_dimension_numbers<[1], [0], [0], [1], [0, 0, 1, 1], [], []>} : vector<16x32xf32>, vector<32x32xf32>, vector<16x32xf32> -> vector<16x32xf32>
    %c0_15 = arith.constant 0 : index
    %c0_16 = arith.constant 0 : index
    %14 = vector.load %arg11[%c0_15, %c0_16] : memref<1x32xf32, #tpu.memory_space<vmem>>, vector<1x32xf32>
    %15 = vector.broadcast %14 : vector<1x32xf32> to vector<16x32xf32>
    %16 = arith.addf %13, %15 : vector<16x32xf32>
    %c0_17 = arith.constant 0 : index
    %c0_18 = arith.constant 0 : index
    %17 = vector.load %arg12[%c0_17, %c0_18] : memref<32x32xf32, #tpu.memory_space<vmem>>, vector<32x32xf32>
    %cst_19 = arith.constant dense<0.000000e+00> : vector<16x32xf32>
    %18 = tpu.matmul %6, %17, %cst_19 {dimension_numbers = #tpu.dot_dimension_numbers<[1], [0], [0], [1], [0, 0, 1, 1], [], []>} : vector<16x32xf32>, vector<32x32xf32>, vector<16x32xf32> -> vector<16x32xf32>
    %c0_20 = arith.constant 0 : index
    %c0_21 = arith.constant 0 : index
    %19 = vector.load %arg13[%c0_20, %c0_21] : memref<1x32xf32, #tpu.memory_space<vmem>>, vector<1x32xf32>
    %20 = vector.broadcast %19 : vector<1x32xf32> to vector<16x32xf32>
    %21 = arith.addf %18, %20 : vector<16x32xf32>
    %c0_22 = arith.constant 0 : index
    %c0_23 = arith.constant 0 : index
    %22 = vector.load %arg2[%c0_22, %c0_23] : memref<128x16xf32, #tpu.memory_space<vmem>>, vector<128x16xf32>
    %cst_24 = arith.constant dense<0.000000e+00> : vector<128x32xf32>
    %23 = tpu.matmul %22, %11, %cst_24 {dimension_numbers = #tpu.dot_dimension_numbers<[1], [0], [0], [1], [0, 0, 1, 1], [], []>} : vector<128x16xf32>, vector<16x32xf32>, vector<128x32xf32> -> vector<128x32xf32>
    %24 = arith.mulf %23, %1 : vector<128x32xf32>
    %cst_25 = arith.constant dense<0.000000e+00> : vector<128x16xf32>
    %25 = tpu.matmul %24, %16, %cst_25 {dimension_numbers = #tpu.dot_dimension_numbers<[1], [1], [0], [0], [0, 0, 1, 0], [], []>} : vector<128x32xf32>, vector<16x32xf32>, vector<128x16xf32> -> vector<128x16xf32>
    %c0_26 = arith.constant 0 : index
    %c0_27 = arith.constant 0 : index
    %26 = vector.load %arg4[%c0_26, %c0_27] : memref<128x16xf32, #tpu.memory_space<vmem>>, vector<128x16xf32>
    %27 = arith.addf %25, %26 : vector<128x16xf32>
    %cst_28 = arith.constant dense<0xFF800000> : vector<128xf32>
    %28 = vector.multi_reduction <maximumf>, %27, %cst_28 [1] : vector<128x16xf32> to vector<128xf32>
    %29 = vector.shape_cast %28 : vector<128xf32> to vector<128x1xf32>
    %30 = vector.broadcast %29 : vector<128x1xf32> to vector<128x16xf32>
    %31 = arith.subf %27, %30 : vector<128x16xf32>
    %32 = math.exp %31 : vector<128x16xf32>
    %cst_29 = arith.constant dense<0.000000e+00> : vector<128xf32>
    %33 = vector.multi_reduction <add>, %32, %cst_29 [1] : vector<128x16xf32> to vector<128xf32>
    %34 = vector.shape_cast %33 : vector<128xf32> to vector<128x1xf32>
    %35 = tpu.reciprocal %34 : vector<128x1xf32> -> vector<128x1xf32>
    %36 = vector.broadcast %35 : vector<128x1xf32> to vector<128x16xf32>
    %37 = arith.mulf %32, %36 : vector<128x16xf32>
    %cst_30 = arith.constant dense<0.000000e+00> : vector<128x32xf32>
    %38 = tpu.matmul %37, %21, %cst_30 {dimension_numbers = #tpu.dot_dimension_numbers<[1], [0], [0], [1], [0, 0, 1, 1], [], []>} : vector<128x16xf32>, vector<16x32xf32>, vector<128x32xf32> -> vector<128x32xf32>
    %39 = arith.mulf %38, %1 : vector<128x32xf32>
    %c0_31 = arith.constant 0 : index
    %c0_32 = arith.constant 0 : index
    %40 = vector.load %arg5[%c0_31, %c0_32] : memref<16x128xf32, #tpu.memory_space<vmem>>, vector<16x128xf32>
    %cst_33 = arith.constant dense<0.000000e+00> : vector<16x32xf32>
    %41 = tpu.matmul %40, %39, %cst_33 {dimension_numbers = #tpu.dot_dimension_numbers<[1], [0], [0], [1], [0, 0, 1, 1], [], []>} : vector<16x128xf32>, vector<128x32xf32>, vector<16x32xf32> -> vector<16x32xf32>
    %c0_34 = arith.constant 0 : index
    %c0_35 = arith.constant 0 : index
    %42 = vector.load %arg14[%c0_34, %c0_35] : memref<32x32xf32, #tpu.memory_space<vmem>>, vector<32x32xf32>
    %cst_36 = arith.constant dense<0.000000e+00> : vector<16x32xf32>
    %43 = tpu.matmul %41, %42, %cst_36 {dimension_numbers = #tpu.dot_dimension_numbers<[1], [0], [0], [1], [0, 0, 1, 1], [], []>} : vector<16x32xf32>, vector<32x32xf32>, vector<16x32xf32> -> vector<16x32xf32>
    %c0_37 = arith.constant 0 : index
    %c0_38 = arith.constant 0 : index
    %44 = vector.load %arg15[%c0_37, %c0_38] : memref<1x32xf32, #tpu.memory_space<vmem>>, vector<1x32xf32>
    %45 = vector.broadcast %44 : vector<1x32xf32> to vector<16x32xf32>
    %46 = arith.addf %43, %45 : vector<16x32xf32>
    %47 = arith.addf %6, %46 : vector<16x32xf32>
    %c0_39 = arith.constant 0 : index
    %c0_40 = arith.constant 0 : index
    %48 = vector.load %arg16[%c0_39, %c0_40] : memref<1x32xf32, #tpu.memory_space<vmem>>, vector<1x32xf32>
    %c0_41 = arith.constant 0 : index
    %c0_42 = arith.constant 0 : index
    %49 = vector.load %arg17[%c0_41, %c0_42] : memref<1x32xf32, #tpu.memory_space<vmem>>, vector<1x32xf32>
    %cst_43 = arith.constant dense<0.000000e+00> : vector<16xf32>
    %50 = vector.multi_reduction <add>, %47, %cst_43 [1] : vector<16x32xf32> to vector<16xf32>
    %51 = vector.shape_cast %50 : vector<16xf32> to vector<16x1xf32>
    %cst_44 = arith.constant 3.200000e+01 : f32
    %52 = vector.broadcast %cst_44 : f32 to vector<16x1xf32>
    %53 = arith.divf %51, %52 : vector<16x1xf32>
    %54 = vector.broadcast %53 : vector<16x1xf32> to vector<16x32xf32>
    %55 = arith.subf %47, %54 : vector<16x32xf32>
    %56 = arith.mulf %55, %55 : vector<16x32xf32>
    %cst_45 = arith.constant dense<0.000000e+00> : vector<16xf32>
    %57 = vector.multi_reduction <add>, %56, %cst_45 [1] : vector<16x32xf32> to vector<16xf32>
    %58 = vector.shape_cast %57 : vector<16xf32> to vector<16x1xf32>
    %cst_46 = arith.constant 3.200000e+01 : f32
    %59 = vector.broadcast %cst_46 : f32 to vector<16x1xf32>
    %60 = arith.divf %58, %59 : vector<16x1xf32>
    %61 = vector.broadcast %53 : vector<16x1xf32> to vector<16x32xf32>
    %62 = arith.subf %47, %61 : vector<16x32xf32>
    %cst_47 = arith.constant 9.99999974E-6 : f32
    %63 = vector.broadcast %cst_47 : f32 to vector<16x1xf32>
    %64 = arith.addf %60, %63 : vector<16x1xf32>
    %65 = math.rsqrt %64 : vector<16x1xf32>
    %66 = vector.broadcast %65 : vector<16x1xf32> to vector<16x32xf32>
    %67 = arith.mulf %62, %66 : vector<16x32xf32>
    %68 = vector.broadcast %48 : vector<1x32xf32> to vector<16x32xf32>
    %69 = arith.mulf %67, %68 : vector<16x32xf32>
    %70 = vector.broadcast %49 : vector<1x32xf32> to vector<16x32xf32>
    %71 = arith.addf %69, %70 : vector<16x32xf32>
    %c0_48 = arith.constant 0 : index
    %c0_49 = arith.constant 0 : index
    %72 = vector.load %arg18[%c0_48, %c0_49] : memref<32x256xf32, #tpu.memory_space<vmem>>, vector<32x256xf32>
    %cst_50 = arith.constant dense<0.000000e+00> : vector<16x256xf32>
    %73 = tpu.matmul %71, %72, %cst_50 {dimension_numbers = #tpu.dot_dimension_numbers<[1], [0], [0], [1], [0, 0, 1, 1], [], []>} : vector<16x32xf32>, vector<32x256xf32>, vector<16x256xf32> -> vector<16x256xf32>
    %c0_51 = arith.constant 0 : index
    %c0_52 = arith.constant 0 : index
    %74 = vector.load %arg19[%c0_51, %c0_52] : memref<1x256xf32, #tpu.memory_space<vmem>>, vector<1x256xf32>
    %75 = vector.broadcast %74 : vector<1x256xf32> to vector<16x256xf32>
    %76 = arith.addf %73, %75 : vector<16x256xf32>
    %cst_53 = arith.constant 0.000000e+00 : f32
    %77 = vector.broadcast %cst_53 : f32 to vector<16x256xf32>
    %78 = arith.maximumf %76, %77 : vector<16x256xf32>
    %c0_54 = arith.constant 0 : index
    %c0_55 = arith.constant 0 : index
    %79 = vector.load %arg20[%c0_54, %c0_55] : memref<256x32xf32, #tpu.memory_space<vmem>>, vector<256x32xf32>
    %cst_56 = arith.constant dense<0.000000e+00> : vector<16x32xf32>
    %80 = tpu.matmul %78, %79, %cst_56 {dimension_numbers = #tpu.dot_dimension_numbers<[1], [0], [0], [1], [0, 0, 1, 1], [], []>} : vector<16x256xf32>, vector<256x32xf32>, vector<16x32xf32> -> vector<16x32xf32>
    %c0_57 = arith.constant 0 : index
    %c0_58 = arith.constant 0 : index
    %81 = vector.load %arg21[%c0_57, %c0_58] : memref<1x32xf32, #tpu.memory_space<vmem>>, vector<1x32xf32>
    %82 = vector.broadcast %81 : vector<1x32xf32> to vector<16x32xf32>
    %83 = arith.addf %80, %82 : vector<16x32xf32>
    %84 = arith.addf %71, %83 : vector<16x32xf32>
    %c0_59 = arith.constant 0 : index
    %c0_60 = arith.constant 0 : index
    %85 = vector.load %arg22[%c0_59, %c0_60] : memref<1x32xf32, #tpu.memory_space<vmem>>, vector<1x32xf32>
    %c0_61 = arith.constant 0 : index
    %c0_62 = arith.constant 0 : index
    %86 = vector.load %arg23[%c0_61, %c0_62] : memref<1x32xf32, #tpu.memory_space<vmem>>, vector<1x32xf32>
    %cst_63 = arith.constant dense<0.000000e+00> : vector<16xf32>
    %87 = vector.multi_reduction <add>, %84, %cst_63 [1] : vector<16x32xf32> to vector<16xf32>
    %88 = vector.shape_cast %87 : vector<16xf32> to vector<16x1xf32>
    %cst_64 = arith.constant 3.200000e+01 : f32
    %89 = vector.broadcast %cst_64 : f32 to vector<16x1xf32>
    %90 = arith.divf %88, %89 : vector<16x1xf32>
    %91 = vector.broadcast %90 : vector<16x1xf32> to vector<16x32xf32>
    %92 = arith.subf %84, %91 : vector<16x32xf32>
    %93 = arith.mulf %92, %92 : vector<16x32xf32>
    %cst_65 = arith.constant dense<0.000000e+00> : vector<16xf32>
    %94 = vector.multi_reduction <add>, %93, %cst_65 [1] : vector<16x32xf32> to vector<16xf32>
    %95 = vector.shape_cast %94 : vector<16xf32> to vector<16x1xf32>
    %cst_66 = arith.constant 3.200000e+01 : f32
    %96 = vector.broadcast %cst_66 : f32 to vector<16x1xf32>
    %97 = arith.divf %95, %96 : vector<16x1xf32>
    %98 = vector.broadcast %90 : vector<16x1xf32> to vector<16x32xf32>
    %99 = arith.subf %84, %98 : vector<16x32xf32>
    %cst_67 = arith.constant 9.99999974E-6 : f32
    %100 = vector.broadcast %cst_67 : f32 to vector<16x1xf32>
    %101 = arith.addf %97, %100 : vector<16x1xf32>
    %102 = math.rsqrt %101 : vector<16x1xf32>
    %103 = vector.broadcast %102 : vector<16x1xf32> to vector<16x32xf32>
    %104 = arith.mulf %99, %103 : vector<16x32xf32>
    %105 = vector.broadcast %85 : vector<1x32xf32> to vector<16x32xf32>
    %106 = arith.mulf %104, %105 : vector<16x32xf32>
    %107 = vector.broadcast %86 : vector<1x32xf32> to vector<16x32xf32>
    %108 = arith.addf %106, %107 : vector<16x32xf32>
    %c0_68 = arith.constant 0 : index
    %c0_69 = arith.constant 0 : index
    %109 = vector.load %arg24[%c0_68, %c0_69] : memref<32x128xf32, #tpu.memory_space<vmem>>, vector<32x128xf32>
    %cst_70 = arith.constant dense<0.000000e+00> : vector<16x128xf32>
    %110 = tpu.matmul %108, %109, %cst_70 {dimension_numbers = #tpu.dot_dimension_numbers<[1], [0], [0], [1], [0, 0, 1, 1], [], []>} : vector<16x32xf32>, vector<32x128xf32>, vector<16x128xf32> -> vector<16x128xf32>
    %c0_71 = arith.constant 0 : index
    %c0_72 = arith.constant 0 : index
    %111 = vector.load %arg25[%c0_71, %c0_72] : memref<1x128xf32, #tpu.memory_space<vmem>>, vector<1x128xf32>
    %112 = vector.broadcast %111 : vector<1x128xf32> to vector<16x128xf32>
    %113 = arith.addf %110, %112 : vector<16x128xf32>
    %c0_73 = arith.constant 0 : index
    %c0_74 = arith.constant 0 : index
    %114 = vector.load %arg26[%c0_73, %c0_74] : memref<16x128xf32, #tpu.memory_space<vmem>>, vector<16x128xf32>
    tpu.vector_store %arg26[%c0_73, %c0_74], %113 {strides = array<i32>} : memref<16x128xf32, #tpu.memory_space<vmem>>, vector<16x128xf32>,
    return
  }
  func.func @transform_0(%arg0: i32) -> (i32, i32) {
    %c0_i32 = arith.constant 0 : i32
    %c0_i32_0 = arith.constant 0 : i32
    return %arg0, %c0_i32 : i32, i32
  }
  func.func @transform_1(%arg0: i32) -> (i32, i32) {
    %c0_i32 = arith.constant 0 : i32
    %c0_i32_0 = arith.constant 0 : i32
    %c0_i32_1 = arith.constant 0 : i32
    return %c0_i32, %c0_i32_0 : i32, i32
  }
  func.func @transform_2(%arg0: i32) -> (i32, i32) {
    %c0_i32 = arith.constant 0 : i32
    %c0_i32_0 = arith.constant 0 : i32
    %c0_i32_1 = arith.constant 0 : i32
    return %c0_i32, %c0_i32_0 : i32, i32
  }
  func.func @transform_3(%arg0: i32) -> (i32, i32) {
    %c0_i32 = arith.constant 0 : i32
    %c0_i32_0 = arith.constant 0 : i32
    %c0_i32_1 = arith.constant 0 : i32
    return %c0_i32, %c0_i32_0 : i32, i32
  }
  func.func @transform_4(%arg0: i32) -> (i32, i32) {
    %c0_i32 = arith.constant 0 : i32
    %c0_i32_0 = arith.constant 0 : i32
    %c0_i32_1 = arith.constant 0 : i32
    return %c0_i32, %c0_i32_0 : i32, i32
  }
  func.func @transform_5(%arg0: i32) -> (i32, i32) {
    %c0_i32 = arith.constant 0 : i32
    %c0_i32_0 = arith.constant 0 : i32
    %c0_i32_1 = arith.constant 0 : i32
    return %c0_i32, %c0_i32_0 : i32, i32
  }
  func.func @transform_6(%arg0: i32) -> (i32, i32) {
    %c0_i32 = arith.constant 0 : i32
    %c0_i32_0 = arith.constant 0 : i32
    %c0_i32_1 = arith.constant 0 : i32
    return %c0_i32, %c0_i32_0 : i32, i32
  }
  func.func @transform_7(%arg0: i32) -> (i32, i32) {
    %c0_i32 = arith.constant 0 : i32
    %c0_i32_0 = arith.constant 0 : i32
    %c0_i32_1 = arith.constant 0 : i32
    return %c0_i32, %c0_i32_0 : i32, i32
  }
  func.func @transform_8(%arg0: i32) -> (i32, i32) {
    %c0_i32 = arith.constant 0 : i32
    %c0_i32_0 = arith.constant 0 : i32
    %c0_i32_1 = arith.constant 0 : i32
    return %c0_i32, %c0_i32_0 : i32, i32
  }
  func.func @transform_9(%arg0: i32) -> (i32, i32) {
    %c0_i32 = arith.constant 0 : i32
    %c0_i32_0 = arith.constant 0 : i32
    %c0_i32_1 = arith.constant 0 : i32
    return %c0_i32, %c0_i32_0 : i32, i32
  }
  func.func @transform_10(%arg0: i32) -> (i32, i32) {
    %c0_i32 = arith.constant 0 : i32
    %c0_i32_0 = arith.constant 0 : i32
    %c0_i32_1 = arith.constant 0 : i32
    return %c0_i32, %c0_i32_0 : i32, i32
  }
  func.func @transform_11(%arg0: i32) -> (i32, i32) {
    %c0_i32 = arith.constant 0 : i32
    %c0_i32_0 = arith.constant 0 : i32
    %c0_i32_1 = arith.constant 0 : i32
    return %c0_i32, %c0_i32_0 : i32, i32
  }
  func.func @transform_12(%arg0: i32) -> (i32, i32) {
    %c0_i32 = arith.constant 0 : i32
    %c0_i32_0 = arith.constant 0 : i32
    %c0_i32_1 = arith.constant 0 : i32
    return %c0_i32, %c0_i32_0 : i32, i32
  }
  func.func @transform_13(%arg0: i32) -> (i32, i32) {
    %c0_i32 = arith.constant 0 : i32
    %c0_i32_0 = arith.constant 0 : i32
    %c0_i32_1 = arith.constant 0 : i32
    return %c0_i32, %c0_i32_0 : i32, i32
  }
  func.func @transform_14(%arg0: i32) -> (i32, i32) {
    %c0_i32 = arith.constant 0 : i32
    %c0_i32_0 = arith.constant 0 : i32
    %c0_i32_1 = arith.constant 0 : i32
    return %c0_i32, %c0_i32_0 : i32, i32
  }
  func.func @transform_15(%arg0: i32) -> (i32, i32) {
    %c0_i32 = arith.constant 0 : i32
    %c0_i32_0 = arith.constant 0 : i32
    %c0_i32_1 = arith.constant 0 : i32
    return %c0_i32, %c0_i32_0 : i32, i32
  }
  func.func @transform_16(%arg0: i32) -> (i32, i32) {
    %c0_i32 = arith.constant 0 : i32
    %c0_i32_0 = arith.constant 0 : i32
    %c0_i32_1 = arith.constant 0 : i32
    return %c0_i32, %c0_i32_0 : i32, i32
  }
  func.func @transform_17(%arg0: i32) -> (i32, i32) {
    %c0_i32 = arith.constant 0 : i32
    %c0_i32_0 = arith.constant 0 : i32
    %c0_i32_1 = arith.constant 0 : i32
    return %c0_i32, %c0_i32_0 : i32, i32
  }
  func.func @transform_18(%arg0: i32) -> (i32, i32) {
    %c0_i32 = arith.constant 0 : i32
    %c0_i32_0 = arith.constant 0 : i32
    %c0_i32_1 = arith.constant 0 : i32
    return %c0_i32, %c0_i32_0 : i32, i32
  }
  func.func @transform_19(%arg0: i32) -> (i32, i32) {
    %c0_i32 = arith.constant 0 : i32
    %c0_i32_0 = arith.constant 0 : i32
    %c0_i32_1 = arith.constant 0 : i32
    return %c0_i32, %c0_i32_0 : i32, i32
  }
  func.func @transform_20(%arg0: i32) -> (i32, i32) {
    %c0_i32 = arith.constant 0 : i32
    %c0_i32_0 = arith.constant 0 : i32
    %c0_i32_1 = arith.constant 0 : i32
    return %c0_i32, %c0_i32_0 : i32, i32
  }
  func.func @transform_21(%arg0: i32) -> (i32, i32) {
    %c0_i32 = arith.constant 0 : i32
    %c0_i32_0 = arith.constant 0 : i32
    %c0_i32_1 = arith.constant 0 : i32
    return %c0_i32, %c0_i32_0 : i32, i32
  }
  func.func @transform_22(%arg0: i32) -> (i32, i32) {
    %c0_i32 = arith.constant 0 : i32
    %c0_i32_0 = arith.constant 0 : i32
    %c0_i32_1 = arith.constant 0 : i32
    return %c0_i32, %c0_i32_0 : i32, i32
  }
  func.func @transform_23(%arg0: i32) -> (i32, i32) {
    %c0_i32 = arith.constant 0 : i32
    %c0_i32_0 = arith.constant 0 : i32
    %c0_i32_1 = arith.constant 0 : i32
    return %c0_i32, %c0_i32_0 : i32, i32
  }
  func.func @transform_24(%arg0: i32) -> (i32, i32) {
    %c0_i32 = arith.constant 0 : i32
    %c0_i32_0 = arith.constant 0 : i32
    %c0_i32_1 = arith.constant 0 : i32
    return %c0_i32, %c0_i32_0 : i32, i32
  }
  func.func @transform_25(%arg0: i32) -> (i32, i32) {
    %c0_i32 = arith.constant 0 : i32
    %c0_i32_0 = arith.constant 0 : i32
    return %arg0, %c0_i32 : i32, i32
  }
}

</mosaic_0001>

<llo_original>
// kernel: tpu_custom_call.1
$region0: #{tpu_custom_call.1}
  #allocation0 [shape = 'u32[]', space=smem, size = 0x4, offset = 0x4, fixed_abs, tag = 'smem constant byte address 0x4 - core index']
  #allocation1 [shape = 'u32[144,128]{1,0:T(1,128)}', space=vmem, size = 0x12000, scoped, tag = 'internal scratch']
  %s0 = inlined_call_operand.vmem [shape: f32[16,16], index: 0, kind: input, shape index: {}]
  %s1 = inlined_call_operand.vmem [shape: f32[128,16], index: 1, kind: input, shape index: {}]
  %s2 = inlined_call_operand.vmem [shape: f32[128,32], index: 2, kind: input, shape index: {}]
  %s3 = inlined_call_operand.vmem [shape: f32[128,16], index: 3, kind: input, shape index: {}]
  %s4 = inlined_call_operand.vmem [shape: f32[16,128], index: 4, kind: input, shape index: {}]
  %s5 = inlined_call_operand.vmem [shape: f32[16,32], index: 5, kind: input, shape index: {}]
  %s6 = inlined_call_operand.vmem [shape: f32[1,32], index: 6, kind: input, shape index: {}]
  %s7 = inlined_call_operand.vmem [shape: f32[32,32], index: 7, kind: input, shape index: {}]
  %s8 = inlined_call_operand.vmem [shape: f32[1,32], index: 8, kind: input, shape index: {}]
  %s9 = inlined_call_operand.vmem [shape: f32[32,32], index: 9, kind: input, shape index: {}]
  %s10 = inlined_call_operand.vmem [shape: f32[1,32], index: 10, kind: input, shape index: {}]
  %s11 = inlined_call_operand.vmem [shape: f32[32,32], index: 11, kind: input, shape index: {}]
  %s12 = inlined_call_operand.vmem [shape: f32[1,32], index: 12, kind: input, shape index: {}]
  %s13 = inlined_call_operand.vmem [shape: f32[32,32], index: 13, kind: input, shape index: {}]
  %s14 = inlined_call_operand.vmem [shape: f32[1,32], index: 14, kind: input, shape index: {}]
  %s15 = inlined_call_operand.vmem [shape: f32[1,32], index: 15, kind: input, shape index: {}]
  %s16 = inlined_call_operand.vmem [shape: f32[1,32], index: 16, kind: input, shape index: {}]
  %s17 = inlined_call_operand.vmem [shape: f32[32,256], index: 17, kind: input, shape index: {}]
  %s18 = inlined_call_operand.vmem [shape: f32[1,256], index: 18, kind: input, shape index: {}]
  %s19 = inlined_call_operand.vmem [shape: f32[256,32], index: 19, kind: input, shape index: {}]
  %s20 = inlined_call_operand.vmem [shape: f32[1,32], index: 20, kind: input, shape index: {}]
  %s21 = inlined_call_operand.vmem [shape: f32[1,32], index: 21, kind: input, shape index: {}]
  %s22 = inlined_call_operand.vmem [shape: f32[1,32], index: 22, kind: input, shape index: {}]
  %s23 = inlined_call_operand.vmem [shape: f32[32,128], index: 23, kind: input, shape index: {}]
  %s24 = inlined_call_operand.vmem [shape: f32[1,128], index: 24, kind: input, shape index: {}]
  %s25 = inlined_call_operand.hbm [shape: f32[16,128], index: 25, kind: output, shape index: {}]
  %s26 = sld [smem:[#allocation0]]
  $region110: #{tpu_custom_call.1} parent=0
    _
  %s28 = ssub.s32 1, %s26
  %s29 = scalar_select 0, %s28, %s26
  $region1: #{tpu_custom_call.1} parent=0
    #allocation2 [shape = 'u8[8192]{0}', space=vmem, size = 0x2000, scoped, tag = 'output window, operand 0, single buffered']
    #allocation3 [shape = 's32[1]{0}', space=sflag, size = 0x4, scoped, tag = 'scoped memory for tpu_custom_call.1']
    %30 = vsyncpa [#allocation3], 0
    // Predicated region
    $region2: #{tpu_custom_call.1} parent=1 // pred_check
      _
    $region3: #{tpu_custom_call.1} parent=1 // pred_check_branch
      %32 = sbr.rel (0) target = $region5
    $region4: #{tpu_custom_call.1} parent=1 // pred_region
      _
    $region5: #{tpu_custom_call.1} parent=1 // pred_fallthru
      _
    // Predicated region
    $region6: #{tpu_custom_call.1} parent=1 // pred_check
      _
    $region7: #{tpu_custom_call.1} parent=1 // pred_check_branch
      %34 = sbr.rel (0) target = $region9
    $region8: #{tpu_custom_call.1} parent=1 // pred_region
      _
    $region9: #{tpu_custom_call.1} parent=1 // pred_fallthru
      _
    // Predicated region
    $region10: #{tpu_custom_call.1} parent=1 // pred_check
      _
    $region11: #{tpu_custom_call.1} parent=1 // pred_check_branch
      %36 = sbr.rel (0) target = $region13
    $region12: #{tpu_custom_call.1} parent=1 // pred_region
      _
    $region13: #{tpu_custom_call.1} parent=1 // pred_fallthru
      _
    // Predicated region
    $region14: #{tpu_custom_call.1} parent=1 // pred_check
      _
    $region15: #{tpu_custom_call.1} parent=1 // pred_check_branch
      %38 = sbr.rel (0) target = $region17
    $region16: #{tpu_custom_call.1} parent=1 // pred_region
      _
    $region17: #{tpu_custom_call.1} parent=1 // pred_fallthru
      _
    // Predicated region
    $region18: #{tpu_custom_call.1} parent=1 // pred_check
      _
    $region19: #{tpu_custom_call.1} parent=1 // pred_check_branch
      %40 = sbr.rel (0) target = $region21
    $region20: #{tpu_custom_call.1} parent=1 // pred_region
      _
    $region21: #{tpu_custom_call.1} parent=1 // pred_fallthru
      _
    // Predicated region
    $region22: #{tpu_custom_call.1} parent=1 // pred_check
      _
    $region23: #{tpu_custom_call.1} parent=1 // pred_check_branch
      %42 = sbr.rel (0) target = $region25
    $region24: #{tpu_custom_call.1} parent=1 // pred_region
      _
    $region25: #{tpu_custom_call.1} parent=1 // pred_fallthru
      _
    // Predicated region
    $region26: #{tpu_custom_call.1} parent=1 // pred_check
      _
    $region27: #{tpu_custom_call.1} parent=1 // pred_check_branch
      %44 = sbr.rel (0) target = $region29
    $region28: #{tpu_custom_call.1} parent=1 // pred_region
      _
    $region29: #{tpu_custom_call.1} parent=1 // pred_fallthru
      _
    // Predicated region
    $region30: #{tpu_custom_call.1} parent=1 // pred_check
      _
    $region31: #{tpu_custom_call.1} parent=1 // pred_check_branch
      %46 = sbr.rel (0) target = $region33
    $region32: #{tpu_custom_call.1} parent=1 // pred_region
      _
    $region33: #{tpu_custom_call.1} parent=1 // pred_fallthru
      _
    // Predicated region
    $region34: #{tpu_custom_call.1} parent=1 // pred_check
      _
    $region35: #{tpu_custom_call.1} parent=1 // pred_check_branch
      %48 = sbr.rel (0) target = $region37
    $region36: #{tpu_custom_call.1} parent=1 // pred_region
      _
    $region37: #{tpu_custom_call.1} parent=1 // pred_fallthru
      _
    // Predicated region
    $region38: #{tpu_custom_call.1} parent=1 // pred_check
      _
    $region39: #{tpu_custom_call.1} parent=1 // pred_check_branch
      %50 = sbr.rel (0) target = $region41
    $region40: #{tpu_custom_call.1} parent=1 // pred_region
      _
    $region41: #{tpu_custom_call.1} parent=1 // pred_fallthru
      _
    // Predicated region
    $region42: #{tpu_custom_call.1} parent=1 // pred_check
      _
    $region43: #{tpu_custom_call.1} parent=1 // pred_check_branch
      %52 = sbr.rel (0) target = $region45
    $region44: #{tpu_custom_call.1} parent=1 // pred_region
      _
    $region45: #{tpu_custom_call.1} parent=1 // pred_fallthru
      _
    // Predicated region
    $region46: #{tpu_custom_call.1} parent=1 // pred_check
      _
    $region47: #{tpu_custom_call.1} parent=1 // pred_check_branch
      %54 = sbr.rel (0) target = $region49
    $region48: #{tpu_custom_call.1} parent=1 // pred_region
      _
    $region49: #{tpu_custom_call.1} parent=1 // pred_fallthru
      _
    // Predicated region
    $region50: #{tpu_custom_call.1} parent=1 // pred_check
      _
    $region51: #{tpu_custom_call.1} parent=1 // pred_check_branch
      %56 = sbr.rel (0) target = $region53
    $region52: #{tpu_custom_call.1} parent=1 // pred_region
      _
    $region53: #{tpu_custom_call.1} parent=1 // pred_fallthru
      _
    // Predicated region
    $region54: #{tpu_custom_call.1} parent=1 // pred_check
      _
    $region55: #{tpu_custom_call.1} parent=1 // pred_check_branch
      %58 = sbr.rel (0) target = $region57
    $region56: #{tpu_custom_call.1} parent=1 // pred_region
      _
    $region57: #{tpu_custom_call.1} parent=1 // pred_fallthru
      _
    // Predicated region
    $region58: #{tpu_custom_call.1} parent=1 // pred_check
      _
    $region59: #{tpu_custom_call.1} parent=1 // pred_check_branch
      %60 = sbr.rel (0) target = $region61
    $region60: #{tpu_custom_call.1} parent=1 // pred_region
      _
    $region61: #{tpu_custom_call.1} parent=1 // pred_fallthru
      _
    // Predicated region
    $region62: #{tpu_custom_call.1} parent=1 // pred_check
      _
    $region63: #{tpu_custom_call.1} parent=1 // pred_check_branch
      %62 = sbr.rel (0) target = $region65
    $region64: #{tpu_custom_call.1} parent=1 // pred_region
      _
    $region65: #{tpu_custom_call.1} parent=1 // pred_fallthru
      _
    // Predicated region
    $region66: #{tpu_custom_call.1} parent=1 // pred_check
      _
    $region67: #{tpu_custom_call.1} parent=1 // pred_check_branch
      %64 = sbr.rel (0) target = $region69
    $region68: #{tpu_custom_call.1} parent=1 // pred_region
      _
    $region69: #{tpu_custom_call.1} parent=1 // pred_fallthru
      _
    // Predicated region
    $region70: #{tpu_custom_call.1} parent=1 // pred_check
      _
    $region71: #{tpu_custom_call.1} parent=1 // pred_check_branch
      %66 = sbr.rel (0) target = $region73
    $region72: #{tpu_custom_call.1} parent=1 // pred_region
      _
    $region73: #{tpu_custom_call.1} parent=1 // pred_fallthru
      _
    // Predicated region
    $region74: #{tpu_custom_call.1} parent=1 // pred_check
      _
    $region75: #{tpu_custom_call.1} parent=1 // pred_check_branch
      %68 = sbr.rel (0) target = $region77
    $region76: #{tpu_custom_call.1} parent=1 // pred_region
      _
    $region77: #{tpu_custom_call.1} parent=1 // pred_fallthru
      _
    // Predicated region
    $region78: #{tpu_custom_call.1} parent=1 // pred_check
      _
    $region79: #{tpu_custom_call.1} parent=1 // pred_check_branch
      %70 = sbr.rel (0) target = $region81
    $region80: #{tpu_custom_call.1} parent=1 // pred_region
      _
    $region81: #{tpu_custom_call.1} parent=1 // pred_fallthru
      _
    // Predicated region
    $region82: #{tpu_custom_call.1} parent=1 // pred_check
      _
    $region83: #{tpu_custom_call.1} parent=1 // pred_check_branch
      %72 = sbr.rel (0) target = $region85
    $region84: #{tpu_custom_call.1} parent=1 // pred_region
      _
    $region85: #{tpu_custom_call.1} parent=1 // pred_fallthru
      _
    // Predicated region
    $region86: #{tpu_custom_call.1} parent=1 // pred_check
      _
    $region87: #{tpu_custom_call.1} parent=1 // pred_check_branch
      %74 = sbr.rel (0) target = $region89
    $region88: #{tpu_custom_call.1} parent=1 // pred_region
      _
    $region89: #{tpu_custom_call.1} parent=1 // pred_fallthru
      _
    // Predicated region
    $region90: #{tpu_custom_call.1} parent=1 // pred_check
      _
    $region91: #{tpu_custom_call.1} parent=1 // pred_check_branch
      %76 = sbr.rel (0) target = $region93
    $region92: #{tpu_custom_call.1} parent=1 // pred_region
      _
    $region93: #{tpu_custom_call.1} parent=1 // pred_fallthru
      _
    // Predicated region
    $region94: #{tpu_custom_call.1} parent=1 // pred_check
      _
    $region95: #{tpu_custom_call.1} parent=1 // pred_check_branch
      %78 = sbr.rel (0) target = $region97
    $region96: #{tpu_custom_call.1} parent=1 // pred_region
      _
    $region97: #{tpu_custom_call.1} parent=1 // pred_fallthru
      _
    // Predicated region
    $region98: #{tpu_custom_call.1} parent=1 // pred_check
      _
    $region99: #{tpu_custom_call.1} parent=1 // pred_check_branch
      %80 = sbr.rel (0) target = $region101
    $region100: #{tpu_custom_call.1} parent=1 // pred_region
      _
    $region101: #{tpu_custom_call.1} parent=1 // pred_fallthru
      _
    %v81 = vld [vmem:[%s0] sm:$0xff]
    %v82 = vld [vmem:[%s0 + $0x8] sm:$0xff]
    %v83 = vld [vmem:[%s2] sm:$0xff]
    %v84 = vld [vmem:[%s2 + $0x8] sm:$0xff]
    %v85 = vld [vmem:[%s2 + $0x10] sm:$0xff]
    %v86 = vld [vmem:[%s2 + $0x18] sm:$0xff]
    %v87 = vld [vmem:[%s2 + $0x20] sm:$0xff]
    %v88 = vld [vmem:[%s2 + $0x28] sm:$0xff]
    %v89 = vld [vmem:[%s2 + $0x30] sm:$0xff]
    %v90 = vld [vmem:[%s2 + $0x38] sm:$0xff]
    %v91 = vld [vmem:[%s2 + $0x40] sm:$0xff]
    %v92 = vld [vmem:[%s2 + $0x48] sm:$0xff]
    %v93 = vld [vmem:[%s2 + $0x50] sm:$0xff]
    %v94 = vld [vmem:[%s2 + $0x58] sm:$0xff]
    %v95 = vld [vmem:[%s2 + $0x60] sm:$0xff]
    %v96 = vld [vmem:[%s2 + $0x68] sm:$0xff]
    %v97 = vld [vmem:[%s2 + $0x70] sm:$0xff]
    %v98 = vld [vmem:[%s2 + $0x78] sm:$0xff]
    %v99 = vld [vmem:[%s5] sm:$0xff]
    %v100 = vld [vmem:[%s5 + $0x8] sm:$0xff]
    %v101 = vld [vmem:[%s6] sm:$0x1]
    %v103 = vlaneseq
    %v104 = vshrl.u32 %v103, 7
    %v105 = vsub.s32 0, %v104
    %v106 = vrot.slane %v101, %v105
    %vm108 = vcmask 130048
    %v110 = vsel %vm108, %v81, 0
    %v113 = vsel %vm108, %v82, 0
    %115 = vmatprep.subr.mxu0 0.0
    %116 = vmatpush1.msra.mxu0 0.0
    %117 = vmatprep.subr.mxu0 0.0
    %118 = vmatpush1.msra.mxu0 0.0
    %119 = vmatprep.subr.mxu0 0.0
    %120 = vmatpush1.msra.mxu0 0.0
    %121 = vmatprep.subr.mxu0 0.0
    %122 = vmatpush1.msra.mxu0 0.0
    %123 = vmatprep.subr.mxu0 0.0
    %124 = vmatpush1.msra.mxu0 0.0
    %125 = vmatprep.subr.mxu0 0.0
    %126 = vmatpush1.msra.mxu0 0.0
    %127 = vmatprep.subr.mxu0 0.0
    %128 = vmatpush1.msra.mxu0 0.0
    %129 = vmatprep.subr.mxu0 0.0
    %130 = vmatpush1.msra.mxu0 0.0
    %131 = vmatprep.subr.mxu0 0.0
    %132 = vmatpush1.msra.mxu0 0.0
    %133 = vmatprep.subr.mxu0 0.0
    %134 = vmatpush1.msra.mxu0 0.0
    %135 = vmatprep.subr.mxu0 0.0
    %136 = vmatpush1.msra.mxu0 0.0
    %137 = vmatprep.subr.mxu0 0.0
    %138 = vmatpush1.msra.mxu0 0.0
    %139 = vmatprep.subr.mxu0 0.0
    %140 = vmatpush1.msra.mxu0 0.0
    %141 = vmatprep.subr.mxu0 0.0
    %142 = vmatpush1.msra.mxu0 0.0
    %143 = vmatprep.subr.mxu0 0.0
    %144 = vmatpush1.msra.mxu0 %v100
    %145 = vmatprep.subr.mxu0 0.0
    %146 = vmatpush1.msra.mxu0 %v99
    %147 = vmatprep.subr.mxu0 0.0
    %148 = vmatpush2.msra.mxu0 0.0
    %149 = vmatprep.subr.mxu0 0.0
    %150 = vmatpush2.msra.mxu0 0.0
    %151 = vmatprep.subr.mxu0 0.0
    %152 = vmatpush2.msra.mxu0 0.0
    %153 = vmatprep.subr.mxu0 0.0
    %154 = vmatpush2.msra.mxu0 0.0
    %155 = vmatprep.subr.mxu0 0.0
    %156 = vmatpush2.msra.mxu0 0.0
    %157 = vmatprep.subr.mxu0 0.0
    %158 = vmatpush2.msra.mxu0 0.0
    %159 = vmatprep.subr.mxu0 0.0
    %160 = vmatpush2.msra.mxu0 0.0
    %161 = vmatprep.subr.mxu0 0.0
    %162 = vmatpush2.msra.mxu0 0.0
    %163 = vmatprep.subr.mxu0 0.0
    %164 = vmatpush2.msra.mxu0 0.0
    %165 = vmatprep.subr.mxu0 0.0
    %166 = vmatpush2.msra.mxu0 0.0
    %167 = vmatprep.subr.mxu0 0.0
    %168 = vmatpush2.msra.mxu0 0.0
    %169 = vmatprep.subr.mxu0 0.0
    %170 = vmatpush2.msra.mxu0 0.0
    %171 = vmatprep.subr.mxu0 0.0
    %172 = vmatpush2.msra.mxu0 0.0
    %173 = vmatprep.subr.mxu0 0.0
    %174 = vmatpush2.msra.mxu0 0.0
    %175 = vmatprep.subr.mxu0 0.0
    %176 = vmatpush2.msra.mxu0 0.0
    %177 = vmatprep.subr.mxu0 0.0
    %178 = vmatpush2.msra.mxu0 0.0
    %179 = vmatprep.mubr.f32.mxu0 0.0
    %180 = vmatmul.mubr.f32.gmra.mxu0 %v110
    %v181 = vpop.f32.mrf.mxu0
    %v182 = vadd.f32 %v106, %v181
    %v183 = vpop.f32.mrf.mxu0
    %184 = vmatprep.mubr.f32.mxu0 0.0
    %185 = vmatmul.mubr.f32.gmra.mxu0 %v113
    %v186 = vpop.f32.mrf.mxu0
    %v187 = vadd.f32 %v106, %v186
    %v188 = vpop.f32.mrf.mxu0
    %189 = vdwg.mxu0
    %v190 = vld [vmem:[%s7] sm:$0xff]
    %v191 = vld [vmem:[%s7 + $0x8] sm:$0xff]
    %v192 = vld [vmem:[%s7 + $0x10] sm:$0xff]
    %v193 = vld [vmem:[%s7 + $0x18] sm:$0xff]
    %v194 = vld [vmem:[%s8] sm:$0x1]
    %v196 = vlaneseq
    %v197 = vshrl.u32 %v196, 7
    %v198 = vsub.s32 0, %v197
    %v199 = vrot.slane %v194, %v198
    %vm201 = vcmask 261120
    %v203 = vsel %vm201, %v182, 0
    %v206 = vsel %vm201, %v187, 0
    %208 = vmatprep.subr.mxu0 0.0
    %209 = vmatpush1.msra.mxu0 0.0
    %210 = vmatprep.subr.mxu0 0.0
    %211 = vmatpush1.msra.mxu0 0.0
    %212 = vmatprep.subr.mxu0 0.0
    %213 = vmatpush1.msra.mxu0 0.0
    %214 = vmatprep.subr.mxu0 0.0
    %215 = vmatpush1.msra.mxu0 0.0
    %216 = vmatprep.subr.mxu0 0.0
    %217 = vmatpush1.msra.mxu0 0.0
    %218 = vmatprep.subr.mxu0 0.0
    %219 = vmatpush1.msra.mxu0 0.0
    %220 = vmatprep.subr.mxu0 0.0
    %221 = vmatpush1.msra.mxu0 0.0
    %222 = vmatprep.subr.mxu0 0.0
    %223 = vmatpush1.msra.mxu0 0.0
    %224 = vmatprep.subr.mxu0 0.0
    %225 = vmatpush1.msra.mxu0 0.0
    %226 = vmatprep.subr.mxu0 0.0
    %227 = vmatpush1.msra.mxu0 0.0
    %228 = vmatprep.subr.mxu0 0.0
    %229 = vmatpush1.msra.mxu0 0.0
    %230 = vmatprep.subr.mxu0 0.0
    %231 = vmatpush1.msra.mxu0 0.0
    %232 = vmatprep.subr.mxu0 0.0
    %233 = vmatpush1.msra.mxu0 %v193
    %234 = vmatprep.subr.mxu0 0.0
    %235 = vmatpush1.msra.mxu0 %v192
    %236 = vmatprep.subr.mxu0 0.0
    %237 = vmatpush1.msra.mxu0 %v191
    %238 = vmatprep.subr.mxu0 0.0
    %239 = vmatpush1.msra.mxu0 %v190
    %240 = vmatprep.subr.mxu0 0.0
    %241 = vmatpush2.msra.mxu0 0.0
    %242 = vmatprep.subr.mxu0 0.0
    %243 = vmatpush2.msra.mxu0 0.0
    %244 = vmatprep.subr.mxu0 0.0
    %245 = vmatpush2.msra.mxu0 0.0
    %246 = vmatprep.subr.mxu0 0.0
    %247 = vmatpush2.msra.mxu0 0.0
    %248 = vmatprep.subr.mxu0 0.0
    %249 = vmatpush2.msra.mxu0 0.0
    %250 = vmatprep.subr.mxu0 0.0
    %251 = vmatpush2.msra.mxu0 0.0
    %252 = vmatprep.subr.mxu0 0.0
    %253 = vmatpush2.msra.mxu0 0.0
    %254 = vmatprep.subr.mxu0 0.0
    %255 = vmatpush2.msra.mxu0 0.0
    %256 = vmatprep.subr.mxu0 0.0
    %257 = vmatpush2.msra.mxu0 0.0
    %258 = vmatprep.subr.mxu0 0.0
    %259 = vmatpush2.msra.mxu0 0.0
    %260 = vmatprep.subr.mxu0 0.0
    %261 = vmatpush2.msra.mxu0 0.0
    %262 = vmatprep.subr.mxu0 0.0
    %263 = vmatpush2.msra.mxu0 0.0
    %264 = vmatprep.subr.mxu0 0.0
    %265 = vmatpush2.msra.mxu0 0.0
    %266 = vmatprep.subr.mxu0 0.0
    %267 = vmatpush2.msra.mxu0 0.0
    %268 = vmatprep.subr.mxu0 0.0
    %269 = vmatpush2.msra.mxu0 0.0
    %270 = vmatprep.subr.mxu0 0.0
    %271 = vmatpush2.msra.mxu0 0.0
    %272 = vmatprep.mubr.f32.mxu0 0.0
    %273 = vmatmul.mubr.f32.gmra.mxu0 %v203
    %v274 = vpop.f32.mrf.mxu0
    %v275 = vadd.f32 %v199, %v274
    %v276 = vpop.f32.mrf.mxu0
    %277 = vmatprep.mubr.f32.mxu0 0.0
    %278 = vmatmul.mubr.f32.gmra.mxu0 %v206
    %v279 = vpop.f32.mrf.mxu0
    %v280 = vadd.f32 %v199, %v279
    %v281 = vpop.f32.mrf.mxu0
    %282 = vdwg.mxu0
    %v283 = vld [vmem:[%s9] sm:$0xff]
    %v284 = vld [vmem:[%s9 + $0x8] sm:$0xff]
    %v285 = vld [vmem:[%s9 + $0x10] sm:$0xff]
    %v286 = vld [vmem:[%s9 + $0x18] sm:$0xff]
    %v287 = vld [vmem:[%s10] sm:$0x1]
    %v289 = vlaneseq
    %v290 = vshrl.u32 %v289, 7
    %v291 = vsub.s32 0, %v290
    %v292 = vrot.slane %v287, %v291
    %294 = vmatprep.subr.mxu0 0.0
    %295 = vmatpush1.msra.mxu0 0.0
    %296 = vmatprep.subr.mxu0 0.0
    %297 = vmatpush1.msra.mxu0 0.0
    %298 = vmatprep.subr.mxu0 0.0
    %299 = vmatpush1.msra.mxu0 0.0
    %300 = vmatprep.subr.mxu0 0.0
    %301 = vmatpush1.msra.mxu0 0.0
    %302 = vmatprep.subr.mxu0 0.0
    %303 = vmatpush1.msra.mxu0 0.0
    %304 = vmatprep.subr.mxu0 0.0
    %305 = vmatpush1.msra.mxu0 0.0
    %306 = vmatprep.subr.mxu0 0.0
    %307 = vmatpush1.msra.mxu0 0.0
    %308 = vmatprep.subr.mxu0 0.0
    %309 = vmatpush1.msra.mxu0 0.0
    %310 = vmatprep.subr.mxu0 0.0
    %311 = vmatpush1.msra.mxu0 0.0
    %312 = vmatprep.subr.mxu0 0.0
    %313 = vmatpush1.msra.mxu0 0.0
    %314 = vmatprep.subr.mxu0 0.0
    %315 = vmatpush1.msra.mxu0 0.0
    %316 = vmatprep.subr.mxu0 0.0
    %317 = vmatpush1.msra.mxu0 0.0
    %318 = vmatprep.subr.mxu0 0.0
    %319 = vmatpush1.msra.mxu0 %v286
    %320 = vmatprep.subr.mxu0 0.0
    %321 = vmatpush1.msra.mxu0 %v285
    %322 = vmatprep.subr.mxu0 0.0
    %323 = vmatpush1.msra.mxu0 %v284
    %324 = vmatprep.subr.mxu0 0.0
    %325 = vmatpush1.msra.mxu0 %v283
    %326 = vmatprep.subr.mxu0 0.0
    %327 = vmatpush2.msra.mxu0 0.0
    %328 = vmatprep.subr.mxu0 0.0
    %329 = vmatpush2.msra.mxu0 0.0
    %330 = vmatprep.subr.mxu0 0.0
    %331 = vmatpush2.msra.mxu0 0.0
    %332 = vmatprep.subr.mxu0 0.0
    %333 = vmatpush2.msra.mxu0 0.0
    %334 = vmatprep.subr.mxu0 0.0
    %335 = vmatpush2.msra.mxu0 0.0
    %336 = vmatprep.subr.mxu0 0.0
    %337 = vmatpush2.msra.mxu0 0.0
    %338 = vmatprep.subr.mxu0 0.0
    %339 = vmatpush2.msra.mxu0 0.0
    %340 = vmatprep.subr.mxu0 0.0
    %341 = vmatpush2.msra.mxu0 0.0
    %342 = vmatprep.subr.mxu0 0.0
    %343 = vmatpush2.msra.mxu0 0.0
    %344 = vmatprep.subr.mxu0 0.0
    %345 = vmatpush2.msra.mxu0 0.0
    %346 = vmatprep.subr.mxu0 0.0
    %347 = vmatpush2.msra.mxu0 0.0
    %348 = vmatprep.subr.mxu0 0.0
    %349 = vmatpush2.msra.mxu0 0.0
    %350 = vmatprep.subr.mxu0 0.0
    %351 = vmatpush2.msra.mxu0 0.0
    %352 = vmatprep.subr.mxu0 0.0
    %353 = vmatpush2.msra.mxu0 0.0
    %354 = vmatprep.subr.mxu0 0.0
    %355 = vmatpush2.msra.mxu0 0.0
    %356 = vmatprep.subr.mxu0 0.0
    %357 = vmatpush2.msra.mxu0 0.0
    %358 = vmatprep.mubr.f32.mxu0 0.0
    %359 = vmatmul.mubr.f32.gmra.mxu0 %v203
    %v360 = vpop.f32.mrf.mxu0
    %v361 = vadd.f32 %v292, %v360
    %v362 = vpop.f32.mrf.mxu0
    %363 = vmatprep.mubr.f32.mxu0 0.0
    %364 = vmatmul.mubr.f32.gmra.mxu0 %v206
    %v365 = vpop.f32.mrf.mxu0
    %v366 = vadd.f32 %v292, %v365
    %v367 = vpop.f32.mrf.mxu0
    %368 = vdwg.mxu0
    %v369 = vld [vmem:[%s11] sm:$0xff]
    %v370 = vld [vmem:[%s11 + $0x8] sm:$0xff]
    %v371 = vld [vmem:[%s11 + $0x10] sm:$0xff]
    %v372 = vld [vmem:[%s11 + $0x18] sm:$0xff]
    %v373 = vld [vmem:[%s12] sm:$0x1]
    %v375 = vlaneseq
    %v376 = vshrl.u32 %v375, 7
    %v377 = vsub.s32 0, %v376
    %v378 = vrot.slane %v373, %v377
    %380 = vmatprep.subr.mxu0 0.0
    %381 = vmatpush1.msra.mxu0 0.0
    %382 = vmatprep.subr.mxu0 0.0
    %383 = vmatpush1.msra.mxu0 0.0
    %384 = vmatprep.subr.mxu0 0.0
    %385 = vmatpush1.msra.mxu0 0.0
    %386 = vmatprep.subr.mxu0 0.0
    %387 = vmatpush1.msra.mxu0 0.0
    %388 = vmatprep.subr.mxu0 0.0
    %389 = vmatpush1.msra.mxu0 0.0
    %390 = vmatprep.subr.mxu0 0.0
    %391 = vmatpush1.msra.mxu0 0.0
    %392 = vmatprep.subr.mxu0 0.0
    %393 = vmatpush1.msra.mxu0 0.0
    %394 = vmatprep.subr.mxu0 0.0
    %395 = vmatpush1.msra.mxu0 0.0
    %396 = vmatprep.subr.mxu0 0.0
    %397 = vmatpush1.msra.mxu0 0.0
    %398 = vmatprep.subr.mxu0 0.0
    %399 = vmatpush1.msra.mxu0 0.0
    %400 = vmatprep.subr.mxu0 0.0
    %401 = vmatpush1.msra.mxu0 0.0
    %402 = vmatprep.subr.mxu0 0.0
    %403 = vmatpush1.msra.mxu0 0.0
    %404 = vmatprep.subr.mxu0 0.0
    %405 = vmatpush1.msra.mxu0 %v372
    %406 = vmatprep.subr.mxu0 0.0
    %407 = vmatpush1.msra.mxu0 %v371
    %408 = vmatprep.subr.mxu0 0.0
    %409 = vmatpush1.msra.mxu0 %v370
    %410 = vmatprep.subr.mxu0 0.0
    %411 = vmatpush1.msra.mxu0 %v369
    %412 = vmatprep.subr.mxu0 0.0
    %413 = vmatpush2.msra.mxu0 0.0
    %414 = vmatprep.subr.mxu0 0.0
    %415 = vmatpush2.msra.mxu0 0.0
    %416 = vmatprep.subr.mxu0 0.0
    %417 = vmatpush2.msra.mxu0 0.0
    %418 = vmatprep.subr.mxu0 0.0
    %419 = vmatpush2.msra.mxu0 0.0
    %420 = vmatprep.subr.mxu0 0.0
    %421 = vmatpush2.msra.mxu0 0.0
    %422 = vmatprep.subr.mxu0 0.0
    %423 = vmatpush2.msra.mxu0 0.0
    %424 = vmatprep.subr.mxu0 0.0
    %425 = vmatpush2.msra.mxu0 0.0
    %426 = vmatprep.subr.mxu0 0.0
    %427 = vmatpush2.msra.mxu0 0.0
    %428 = vmatprep.subr.mxu0 0.0
    %429 = vmatpush2.msra.mxu0 0.0
    %430 = vmatprep.subr.mxu0 0.0
    %431 = vmatpush2.msra.mxu0 0.0
    %432 = vmatprep.subr.mxu0 0.0
    %433 = vmatpush2.msra.mxu0 0.0
    %434 = vmatprep.subr.mxu0 0.0
    %435 = vmatpush2.msra.mxu0 0.0
    %436 = vmatprep.subr.mxu0 0.0
    %437 = vmatpush2.msra.mxu0 0.0
    %438 = vmatprep.subr.mxu0 0.0
    %439 = vmatpush2.msra.mxu0 0.0
    %440 = vmatprep.subr.mxu0 0.0
    %441 = vmatpush2.msra.mxu0 0.0
    %442 = vmatprep.subr.mxu0 0.0
    %443 = vmatpush2.msra.mxu0 0.0
    %444 = vmatprep.mubr.f32.mxu0 0.0
    %445 = vmatmul.mubr.f32.gmra.mxu0 %v203
    %v446 = vpop.f32.mrf.mxu0
    %v447 = vadd.f32 %v378, %v446
    %v448 = vpop.f32.mrf.mxu0
    %449 = vmatprep.mubr.f32.mxu0 0.0
    %450 = vmatmul.mubr.f32.gmra.mxu0 %v206
    %v451 = vpop.f32.mrf.mxu0
    %v452 = vadd.f32 %v378, %v451
    %v453 = vpop.f32.mrf.mxu0
    %454 = vdwg.mxu0
    %v455 = vld [vmem:[%s1] sm:$0xff]
    %v456 = vld [vmem:[%s1 + $0x8] sm:$0xff]
    %v457 = vld [vmem:[%s1 + $0x10] sm:$0xff]
    %v458 = vld [vmem:[%s1 + $0x18] sm:$0xff]
    %v459 = vld [vmem:[%s1 + $0x20] sm:$0xff]
    %v460 = vld [vmem:[%s1 + $0x28] sm:$0xff]
    %v461 = vld [vmem:[%s1 + $0x30] sm:$0xff]
    %v462 = vld [vmem:[%s1 + $0x38] sm:$0xff]
    %v463 = vld [vmem:[%s1 + $0x40] sm:$0xff]
    %v464 = vld [vmem:[%s1 + $0x48] sm:$0xff]
    %v465 = vld [vmem:[%s1 + $0x50] sm:$0xff]
    %v466 = vld [vmem:[%s1 + $0x58] sm:$0xff]
    %v467 = vld [vmem:[%s1 + $0x60] sm:$0xff]
    %v468 = vld [vmem:[%s1 + $0x68] sm:$0xff]
    %v469 = vld [vmem:[%s1 + $0x70] sm:$0xff]
    %v470 = vld [vmem:[%s1 + $0x78] sm:$0xff]
    %v472 = vsel %vm108, %v455, 0
    %v475 = vsel %vm108, %v456, 0
    %v478 = vsel %vm108, %v457, 0
    %v481 = vsel %vm108, %v458, 0
    %v484 = vsel %vm108, %v459, 0
    %v487 = vsel %vm108, %v460, 0
    %v490 = vsel %vm108, %v461, 0
    %v493 = vsel %vm108, %v462, 0
    %v496 = vsel %vm108, %v463, 0
    %v499 = vsel %vm108, %v464, 0
    %v502 = vsel %vm108, %v465, 0
    %v505 = vsel %vm108, %v466, 0
    %v508 = vsel %vm108, %v467, 0
    %v511 = vsel %vm108, %v468, 0
    %v514 = vsel %vm108, %v469, 0
    %v517 = vsel %vm108, %v470, 0
    %519 = vmatprep.subr.mxu0 0.0
    %520 = vmatpush1.msra.mxu0 0.0
    %521 = vmatprep.subr.mxu0 0.0
    %522 = vmatpush1.msra.mxu0 0.0
    %523 = vmatprep.subr.mxu0 0.0
    %524 = vmatpush1.msra.mxu0 0.0
    %525 = vmatprep.subr.mxu0 0.0
    %526 = vmatpush1.msra.mxu0 0.0
    %527 = vmatprep.subr.mxu0 0.0
    %528 = vmatpush1.msra.mxu0 0.0
    %529 = vmatprep.subr.mxu0 0.0
    %530 = vmatpush1.msra.mxu0 0.0
    %531 = vmatprep.subr.mxu0 0.0
    %532 = vmatpush1.msra.mxu0 0.0
    %533 = vmatprep.subr.mxu0 0.0
    %534 = vmatpush1.msra.mxu0 0.0
    %535 = vmatprep.subr.mxu0 0.0
    %536 = vmatpush1.msra.mxu0 0.0
    %537 = vmatprep.subr.mxu0 0.0
    %538 = vmatpush1.msra.mxu0 0.0
    %539 = vmatprep.subr.mxu0 0.0
    %540 = vmatpush1.msra.mxu0 0.0
    %541 = vmatprep.subr.mxu0 0.0
    %542 = vmatpush1.msra.mxu0 0.0
    %543 = vmatprep.subr.mxu0 0.0
    %544 = vmatpush1.msra.mxu0 0.0
    %545 = vmatprep.subr.mxu0 0.0
    %546 = vmatpush1.msra.mxu0 0.0
    %547 = vmatprep.subr.mxu0 0.0
    %548 = vmatpush1.msra.mxu0 %v280
    %549 = vmatprep.subr.mxu0 0.0
    %550 = vmatpush1.msra.mxu0 %v275
    %551 = vmatprep.subr.mxu0 0.0
    %552 = vmatpush2.msra.mxu0 0.0
    %553 = vmatprep.subr.mxu0 0.0
    %554 = vmatpush2.msra.mxu0 0.0
    %555 = vmatprep.subr.mxu0 0.0
    %556 = vmatpush2.msra.mxu0 0.0
    %557 = vmatprep.subr.mxu0 0.0
    %558 = vmatpush2.msra.mxu0 0.0
    %559 = vmatprep.subr.mxu0 0.0
    %560 = vmatpush2.msra.mxu0 0.0
    %561 = vmatprep.subr.mxu0 0.0
    %562 = vmatpush2.msra.mxu0 0.0
    %563 = vmatprep.subr.mxu0 0.0
    %564 = vmatpush2.msra.mxu0 0.0
    %565 = vmatprep.subr.mxu0 0.0
    %566 = vmatpush2.msra.mxu0 0.0
    %567 = vmatprep.subr.mxu0 0.0
    %568 = vmatpush2.msra.mxu0 0.0
    %569 = vmatprep.subr.mxu0 0.0
    %570 = vmatpush2.msra.mxu0 0.0
    %571 = vmatprep.subr.mxu0 0.0
    %572 = vmatpush2.msra.mxu0 0.0
    %573 = vmatprep.subr.mxu0 0.0
    %574 = vmatpush2.msra.mxu0 0.0
    %575 = vmatprep.subr.mxu0 0.0
    %576 = vmatpush2.msra.mxu0 0.0
    %577 = vmatprep.subr.mxu0 0.0
    %578 = vmatpush2.msra.mxu0 0.0
    %579 = vmatprep.subr.mxu0 0.0
    %580 = vmatpush2.msra.mxu0 0.0
    %581 = vmatprep.subr.mxu0 0.0
    %582 = vmatpush2.msra.mxu0 0.0
    %583 = vmatprep.mubr.f32.mxu0 0.0
    %584 = vmatmul.mubr.f32.gmra.mxu0 %v472
    %v585 = vpop.f32.mrf.mxu0
    %v586 = vadd.f32 0.0, %v585
    %v587 = vpop.f32.mrf.mxu0
    %588 = vmatprep.mubr.f32.mxu0 0.0
    %589 = vmatmul.mubr.f32.gmra.mxu0 %v475
    %v590 = vpop.f32.mrf.mxu0
    %v591 = vadd.f32 0.0, %v590
    %v592 = vpop.f32.mrf.mxu0
    %593 = vmatprep.mubr.f32.mxu0 0.0
    %594 = vmatmul.mubr.f32.gmra.mxu0 %v478
    %v595 = vpop.f32.mrf.mxu0
    %v596 = vadd.f32 0.0, %v595
    %v597 = vpop.f32.mrf.mxu0
    %598 = vmatprep.mubr.f32.mxu0 0.0
    %599 = vmatmul.mubr.f32.gmra.mxu0 %v481
    %v600 = vpop.f32.mrf.mxu0
    %v601 = vadd.f32 0.0, %v600
    %v602 = vpop.f32.mrf.mxu0
    %603 = vmatprep.mubr.f32.mxu0 0.0
    %604 = vmatmul.mubr.f32.gmra.mxu0 %v484
    %v605 = vpop.f32.mrf.mxu0
    %v606 = vadd.f32 0.0, %v605
    %v607 = vpop.f32.mrf.mxu0
    %608 = vmatprep.mubr.f32.mxu0 0.0
    %609 = vmatmul.mubr.f32.gmra.mxu0 %v487
    %v610 = vpop.f32.mrf.mxu0
    %v611 = vadd.f32 0.0, %v610
    %v612 = vpop.f32.mrf.mxu0
    %613 = vmatprep.mubr.f32.mxu0 0.0
    %614 = vmatmul.mubr.f32.gmra.mxu0 %v490
    %v615 = vpop.f32.mrf.mxu0
    %v616 = vadd.f32 0.0, %v615
    %v617 = vpop.f32.mrf.mxu0
    %618 = vmatprep.mubr.f32.mxu0 0.0
    %619 = vmatmul.mubr.f32.gmra.mxu0 %v493
    %v620 = vpop.f32.mrf.mxu0
    %v621 = vadd.f32 0.0, %v620
    %v622 = vpop.f32.mrf.mxu0
    %623 = vmatprep.mubr.f32.mxu0 0.0
    %624 = vmatmul.mubr.f32.gmra.mxu0 %v496
    %v625 = vpop.f32.mrf.mxu0
    %v626 = vadd.f32 0.0, %v625
    %v627 = vpop.f32.mrf.mxu0
    %628 = vmatprep.mubr.f32.mxu0 0.0
    %629 = vmatmul.mubr.f32.gmra.mxu0 %v499
    %v630 = vpop.f32.mrf.mxu0
    %v631 = vadd.f32 0.0, %v630
    %v632 = vpop.f32.mrf.mxu0
    %633 = vmatprep.mubr.f32.mxu0 0.0
    %634 = vmatmul.mubr.f32.gmra.mxu0 %v502
    %v635 = vpop.f32.mrf.mxu0
    %v636 = vadd.f32 0.0, %v635
    %v637 = vpop.f32.mrf.mxu0
    %638 = vmatprep.mubr.f32.mxu0 0.0
    %639 = vmatmul.mubr.f32.gmra.mxu0 %v505
    %v640 = vpop.f32.mrf.mxu0
    %v641 = vadd.f32 0.0, %v640
    %v642 = vpop.f32.mrf.mxu0
    %643 = vmatprep.mubr.f32.mxu0 0.0
    %644 = vmatmul.mubr.f32.gmra.mxu0 %v508
    %v645 = vpop.f32.mrf.mxu0
    %v646 = vadd.f32 0.0, %v645
    %v647 = vpop.f32.mrf.mxu0
    %648 = vmatprep.mubr.f32.mxu0 0.0
    %649 = vmatmul.mubr.f32.gmra.mxu0 %v511
    %v650 = vpop.f32.mrf.mxu0
    %v651 = vadd.f32 0.0, %v650
    %v652 = vpop.f32.mrf.mxu0
    %653 = vmatprep.mubr.f32.mxu0 0.0
    %654 = vmatmul.mubr.f32.gmra.mxu0 %v514
    %v655 = vpop.f32.mrf.mxu0
    %v656 = vadd.f32 0.0, %v655
    %v657 = vpop.f32.mrf.mxu0
    %658 = vmatprep.mubr.f32.mxu0 0.0
    %659 = vmatmul.mubr.f32.gmra.mxu0 %v517
    %v660 = vpop.f32.mrf.mxu0
    %v661 = vadd.f32 0.0, %v660
    %v662 = vpop.f32.mrf.mxu0
    %663 = vdwg.mxu0
    %v664 = vmul.f32 %v586, %v83
    %v665 = vmul.f32 %v591, %v84
    %v666 = vmul.f32 %v596, %v85
    %v667 = vmul.f32 %v601, %v86
    %v668 = vmul.f32 %v606, %v87
    %v669 = vmul.f32 %v611, %v88
    %v670 = vmul.f32 %v616, %v89
    %v671 = vmul.f32 %v621, %v90
    %v672 = vmul.f32 %v626, %v91
    %v673 = vmul.f32 %v631, %v92
    %v674 = vmul.f32 %v636, %v93
    %v675 = vmul.f32 %v641, %v94
    %v676 = vmul.f32 %v646, %v95
    %v677 = vmul.f32 %v651, %v96
    %v678 = vmul.f32 %v656, %v97
    %v679 = vmul.f32 %v661, %v98
    %v680 = vld [vmem:[%s3] sm:$0xff]
    %v681 = vld [vmem:[%s3 + $0x8] sm:$0xff]
    %v682 = vld [vmem:[%s3 + $0x10] sm:$0xff]
    %v683 = vld [vmem:[%s3 + $0x18] sm:$0xff]
    %v684 = vld [vmem:[%s3 + $0x20] sm:$0xff]
    %v685 = vld [vmem:[%s3 + $0x28] sm:$0xff]
    %v686 = vld [vmem:[%s3 + $0x30] sm:$0xff]
    %v687 = vld [vmem:[%s3 + $0x38] sm:$0xff]
    %v688 = vld [vmem:[%s3 + $0x40] sm:$0xff]
    %v689 = vld [vmem:[%s3 + $0x48] sm:$0xff]
    %v690 = vld [vmem:[%s3 + $0x50] sm:$0xff]
    %v691 = vld [vmem:[%s3 + $0x58] sm:$0xff]
    %v692 = vld [vmem:[%s3 + $0x60] sm:$0xff]
    %v693 = vld [vmem:[%s3 + $0x68] sm:$0xff]
    %v694 = vld [vmem:[%s3 + $0x70] sm:$0xff]
    %v695 = vld [vmem:[%s3 + $0x78] sm:$0xff]
    %v697 = vsel %vm201, %v664, 0
    %v700 = vsel %vm201, %v665, 0
    %v703 = vsel %vm201, %v666, 0
    %v706 = vsel %vm201, %v667, 0
    %v709 = vsel %vm201, %v668, 0
    %v712 = vsel %vm201, %v669, 0
    %v715 = vsel %vm201, %v670, 0
    %v718 = vsel %vm201, %v671, 0
    %v721 = vsel %vm201, %v672, 0
    %v724 = vsel %vm201, %v673, 0
    %v727 = vsel %vm201, %v674, 0
    %v730 = vsel %vm201, %v675, 0
    %v733 = vsel %vm201, %v676, 0
    %v736 = vsel %vm201, %v677, 0
    %v739 = vsel %vm201, %v678, 0
    %v742 = vsel %vm201, %v679, 0
    %v745 = vsel %vm201, %v361, 0
    %v748 = vsel %vm201, %v366, 0
    %750 = vmatprep.subr.mxu0 0.0
    %751 = vmatpush1.xpose.msra.mxu0 0.0
    %752 = vmatprep.subr.mxu0 0.0
    %753 = vmatpush1.xpose.msra.mxu0 0.0
    %754 = vmatprep.subr.mxu0 0.0
    %755 = vmatpush1.xpose.msra.mxu0 0.0
    %756 = vmatprep.subr.mxu0 0.0
    %757 = vmatpush1.xpose.msra.mxu0 0.0
    %758 = vmatprep.subr.mxu0 0.0
    %759 = vmatpush1.xpose.msra.mxu0 0.0
    %760 = vmatprep.subr.mxu0 0.0
    %761 = vmatpush1.xpose.msra.mxu0 0.0
    %762 = vmatprep.subr.mxu0 0.0
    %763 = vmatpush1.xpose.msra.mxu0 0.0
    %764 = vmatprep.subr.mxu0 0.0
    %765 = vmatpush1.xpose.msra.mxu0 0.0
    %766 = vmatprep.subr.mxu0 0.0
    %767 = vmatpush1.xpose.msra.mxu0 0.0
    %768 = vmatprep.subr.mxu0 0.0
    %769 = vmatpush1.xpose.msra.mxu0 0.0
    %770 = vmatprep.subr.mxu0 0.0
    %771 = vmatpush1.xpose.msra.mxu0 0.0
    %772 = vmatprep.subr.mxu0 0.0
    %773 = vmatpush1.xpose.msra.mxu0 0.0
    %774 = vmatprep.subr.mxu0 0.0
    %775 = vmatpush1.xpose.msra.mxu0 0.0
    %776 = vmatprep.subr.mxu0 0.0
    %777 = vmatpush1.xpose.msra.mxu0 0.0
    %778 = vmatprep.subr.mxu0 0.0
    %779 = vmatpush1.xpose.msra.mxu0 %v748
    %780 = vmatprep.subr.mxu0 0.0
    %781 = vmatpush1.xpose.msra.mxu0 %v745
    %782 = vmatprep.subr.mxu0 0.0
    %783 = vmatpush2.xpose.msra.mxu0 0.0
    %784 = vmatprep.subr.mxu0 0.0
    %785 = vmatpush2.xpose.msra.mxu0 0.0
    %786 = vmatprep.subr.mxu0 0.0
    %787 = vmatpush2.xpose.msra.mxu0 0.0
    %788 = vmatprep.subr.mxu0 0.0
    %789 = vmatpush2.xpose.msra.mxu0 0.0
    %790 = vmatprep.subr.mxu0 0.0
    %791 = vmatpush2.xpose.msra.mxu0 0.0
    %792 = vmatprep.subr.mxu0 0.0
    %793 = vmatpush2.xpose.msra.mxu0 0.0
    %794 = vmatprep.subr.mxu0 0.0
    %795 = vmatpush2.xpose.msra.mxu0 0.0
    %796 = vmatprep.subr.mxu0 0.0
    %797 = vmatpush2.xpose.msra.mxu0 0.0
    %798 = vmatprep.subr.mxu0 0.0
    %799 = vmatpush2.xpose.msra.mxu0 0.0
    %800 = vmatprep.subr.mxu0 0.0
    %801 = vmatpush2.xpose.msra.mxu0 0.0
    %802 = vmatprep.subr.mxu0 0.0
    %803 = vmatpush2.xpose.msra.mxu0 0.0
    %804 = vmatprep.subr.mxu0 0.0
    %805 = vmatpush2.xpose.msra.mxu0 0.0
    %806 = vmatprep.subr.mxu0 0.0
    %807 = vmatpush2.xpose.msra.mxu0 0.0
    %808 = vmatprep.subr.mxu0 0.0
    %809 = vmatpush2.xpose.msra.mxu0 0.0
    %810 = vmatprep.subr.mxu0 0.0
    %811 = vmatpush2.xpose.msra.mxu0 0.0
    %812 = vmatprep.subr.mxu0 0.0
    %813 = vmatpush2.xpose.msra.mxu0 0.0
    %814 = vmatprep.mubr.f32.mxu0 0.0
    %815 = vmatmul.mubr.f32.gmra.mxu0 %v697
    %v816 = vpop.f32.mrf.mxu0
    %v817 = vadd.f32 %v680, %v816
    %v818 = vpop.f32.mrf.mxu0
    %819 = vmatprep.mubr.f32.mxu0 0.0
    %820 = vmatmul.mubr.f32.gmra.mxu0 %v700
    %v821 = vpop.f32.mrf.mxu0
    %v822 = vadd.f32 %v681, %v821
    %v823 = vpop.f32.mrf.mxu0
    %824 = vmatprep.mubr.f32.mxu0 0.0
    %825 = vmatmul.mubr.f32.gmra.mxu0 %v703
    %v826 = vpop.f32.mrf.mxu0
    %v827 = vadd.f32 %v682, %v826
    %v828 = vpop.f32.mrf.mxu0
    %829 = vmatprep.mubr.f32.mxu0 0.0
    %830 = vmatmul.mubr.f32.gmra.mxu0 %v706
    %v831 = vpop.f32.mrf.mxu0
    %v832 = vadd.f32 %v683, %v831
    %v833 = vpop.f32.mrf.mxu0
    %834 = vmatprep.mubr.f32.mxu0 0.0
    %835 = vmatmul.mubr.f32.gmra.mxu0 %v709
    %v836 = vpop.f32.mrf.mxu0
    %v837 = vadd.f32 %v684, %v836
    %v838 = vpop.f32.mrf.mxu0
    %839 = vmatprep.mubr.f32.mxu0 0.0
    %840 = vmatmul.mubr.f32.gmra.mxu0 %v712
    %v841 = vpop.f32.mrf.mxu0
    %v842 = vadd.f32 %v685, %v841
    %v843 = vpop.f32.mrf.mxu0
    %844 = vmatprep.mubr.f32.mxu0 0.0
    %845 = vmatmul.mubr.f32.gmra.mxu0 %v715
    %v846 = vpop.f32.mrf.mxu0
    %v847 = vadd.f32 %v686, %v846
    %v848 = vpop.f32.mrf.mxu0
    %849 = vmatprep.mubr.f32.mxu0 0.0
    %850 = vmatmul.mubr.f32.gmra.mxu0 %v718
    %v851 = vpop.f32.mrf.mxu0
    %v852 = vadd.f32 %v687, %v851
    %v853 = vpop.f32.mrf.mxu0
    %854 = vmatprep.mubr.f32.mxu0 0.0
    %855 = vmatmul.mubr.f32.gmra.mxu0 %v721
    %v856 = vpop.f32.mrf.mxu0
    %v857 = vadd.f32 %v688, %v856
    %v858 = vpop.f32.mrf.mxu0
    %859 = vmatprep.mubr.f32.mxu0 0.0
    %860 = vmatmul.mubr.f32.gmra.mxu0 %v724
    %v861 = vpop.f32.mrf.mxu0
    %v862 = vadd.f32 %v689, %v861
    %v863 = vpop.f32.mrf.mxu0
    %864 = vmatprep.mubr.f32.mxu0 0.0
    %865 = vmatmul.mubr.f32.gmra.mxu0 %v727
    %v866 = vpop.f32.mrf.mxu0
    %v867 = vadd.f32 %v690, %v866
    %v868 = vpop.f32.mrf.mxu0
    %869 = vmatprep.mubr.f32.mxu0 0.0
    %870 = vmatmul.mubr.f32.gmra.mxu0 %v730
    %v871 = vpop.f32.mrf.mxu0
    %v872 = vadd.f32 %v691, %v871
    %v873 = vpop.f32.mrf.mxu0
    %874 = vmatprep.mubr.f32.mxu0 0.0
    %875 = vmatmul.mubr.f32.gmra.mxu0 %v733
    %v876 = vpop.f32.mrf.mxu0
    %v877 = vadd.f32 %v692, %v876
    %v878 = vpop.f32.mrf.mxu0
    %879 = vmatprep.mubr.f32.mxu0 0.0
    %880 = vmatmul.mubr.f32.gmra.mxu0 %v736
    %v881 = vpop.f32.mrf.mxu0
    %v882 = vadd.f32 %v693, %v881
    %v883 = vpop.f32.mrf.mxu0
    %884 = vmatprep.mubr.f32.mxu0 0.0
    %885 = vmatmul.mubr.f32.gmra.mxu0 %v739
    %v886 = vpop.f32.mrf.mxu0
    %v887 = vadd.f32 %v694, %v886
    %v888 = vpop.f32.mrf.mxu0
    %889 = vmatprep.mubr.f32.mxu0 0.0
    %890 = vmatmul.mubr.f32.gmra.mxu0 %v742
    %v891 = vpop.f32.mrf.mxu0
    %v892 = vadd.f32 %v695, %v891
    %v893 = vpop.f32.mrf.mxu0
    %894 = vdwg.mxu0
    %v895 = vsel %vm108, %v817, -inf
    %896 = vmax.xlane.f32.xlu0 %v895
    %v897 = vpop.xlane.xlu0 %896
    %v898 = vsel %vm108, %v822, -inf
    %899 = vmax.xlane.f32.xlu0 %v898
    %v900 = vpop.xlane.xlu0 %899
    %v901 = vsel %vm108, %v827, -inf
    %902 = vmax.xlane.f32.xlu0 %v901
    %v903 = vpop.xlane.xlu0 %902
    %v904 = vsel %vm108, %v832, -inf
    %905 = vmax.xlane.f32.xlu0 %v904
    %v906 = vpop.xlane.xlu0 %905
    %v907 = vsel %vm108, %v837, -inf
    %908 = vmax.xlane.f32.xlu0 %v907
    %v909 = vpop.xlane.xlu0 %908
    %v910 = vsel %vm108, %v842, -inf
    %911 = vmax.xlane.f32.xlu0 %v910
    %v912 = vpop.xlane.xlu0 %911
    %v913 = vsel %vm108, %v847, -inf
    %914 = vmax.xlane.f32.xlu0 %v913
    %v915 = vpop.xlane.xlu0 %914
    %v916 = vsel %vm108, %v852, -inf
    %917 = vmax.xlane.f32.xlu0 %v916
    %v918 = vpop.xlane.xlu0 %917
    %v919 = vsel %vm108, %v857, -inf
    %920 = vmax.xlane.f32.xlu0 %v919
    %v921 = vpop.xlane.xlu0 %920
    %v922 = vsel %vm108, %v862, -inf
    %923 = vmax.xlane.f32.xlu0 %v922
    %v924 = vpop.xlane.xlu0 %923
    %v925 = vsel %vm108, %v867, -inf
    %926 = vmax.xlane.f32.xlu0 %v925
    %v927 = vpop.xlane.xlu0 %926
    %v928 = vsel %vm108, %v872, -inf
    %929 = vmax.xlane.f32.xlu0 %v928
    %v930 = vpop.xlane.xlu0 %929
    %v931 = vsel %vm108, %v877, -inf
    %932 = vmax.xlane.f32.xlu0 %v931
    %v933 = vpop.xlane.xlu0 %932
    %v934 = vsel %vm108, %v882, -inf
    %935 = vmax.xlane.f32.xlu0 %v934
    %v936 = vpop.xlane.xlu0 %935
    %v937 = vsel %vm108, %v887, -inf
    %938 = vmax.xlane.f32.xlu0 %v937
    %v939 = vpop.xlane.xlu0 %938
    %v940 = vsel %vm108, %v892, -inf
    %941 = vmax.xlane.f32.xlu0 %v940
    %v942 = vpop.xlane.xlu0 %941
    %v943 = vsub.f32 %v817, %v897
    %v944 = vsub.f32 %v822, %v900
    %v945 = vsub.f32 %v827, %v903
    %v946 = vsub.f32 %v832, %v906
    %v947 = vsub.f32 %v837, %v909
    %v948 = vsub.f32 %v842, %v912
    %v949 = vsub.f32 %v847, %v915
    %v950 = vsub.f32 %v852, %v918
    %v951 = vsub.f32 %v857, %v921
    %v952 = vsub.f32 %v862, %v924
    %v953 = vsub.f32 %v867, %v927
    %v954 = vsub.f32 %v872, %v930
    %v955 = vsub.f32 %v877, %v933
    %v956 = vsub.f32 %v882, %v936
    %v957 = vsub.f32 %v887, %v939
    %v958 = vsub.f32 %v892, %v942
    %v959 = vmul.f32 %v943, 1.442695
    %v960 = vpow.pop %v959
    %v961 = vmul.f32 %v944, 1.442695
    %v962 = vpow.pop %v961
    %v963 = vmul.f32 %v945, 1.442695
    %v964 = vpow.pop %v963
    %v965 = vmul.f32 %v946, 1.442695
    %v966 = vpow.pop %v965
    %v967 = vmul.f32 %v947, 1.442695
    %v968 = vpow.pop %v967
    %v969 = vmul.f32 %v948, 1.442695
    %v970 = vpow.pop %v969
    %v971 = vmul.f32 %v949, 1.442695
    %v972 = vpow.pop %v971
    %v973 = vmul.f32 %v950, 1.442695
    %v974 = vpow.pop %v973
    %v975 = vmul.f32 %v951, 1.442695
    %v976 = vpow.pop %v975
    %v977 = vmul.f32 %v952, 1.442695
    %v978 = vpow.pop %v977
    %v979 = vmul.f32 %v953, 1.442695
    %v980 = vpow.pop %v979
    %v981 = vmul.f32 %v954, 1.442695
    %v982 = vpow.pop %v981
    %v983 = vmul.f32 %v955, 1.442695
    %v984 = vpow.pop %v983
    %v985 = vmul.f32 %v956, 1.442695
    %v986 = vpow.pop %v985
    %v987 = vmul.f32 %v957, 1.442695
    %v988 = vpow.pop %v987
    %v989 = vmul.f32 %v958, 1.442695
    %v990 = vpow.pop %v989
    %v991 = vsel %vm108, %v960, 0.0
    %992 = vadd.xlane.f32.xlu0 %v991
    %v993 = vpop.xlane.xlu0 %992
    %v994 = vsel %vm108, %v962, 0.0
    %995 = vadd.xlane.f32.xlu0 %v994
    %v996 = vpop.xlane.xlu0 %995
    %v997 = vsel %vm108, %v964, 0.0
    %998 = vadd.xlane.f32.xlu0 %v997
    %v999 = vpop.xlane.xlu0 %998
    %v1000 = vsel %vm108, %v966, 0.0
    %1001 = vadd.xlane.f32.xlu0 %v1000
    %v1002 = vpop.xlane.xlu0 %1001
    %v1003 = vsel %vm108, %v968, 0.0
    %1004 = vadd.xlane.f32.xlu0 %v1003
    %v1005 = vpop.xlane.xlu0 %1004
    %v1006 = vsel %vm108, %v970, 0.0
    %1007 = vadd.xlane.f32.xlu0 %v1006
    %v1008 = vpop.xlane.xlu0 %1007
    %v1009 = vsel %vm108, %v972, 0.0
    %1010 = vadd.xlane.f32.xlu0 %v1009
    %v1011 = vpop.xlane.xlu0 %1010
    %v1012 = vsel %vm108, %v974, 0.0
    %1013 = vadd.xlane.f32.xlu0 %v1012
    %v1014 = vpop.xlane.xlu0 %1013
    %v1015 = vsel %vm108, %v976, 0.0
    %1016 = vadd.xlane.f32.xlu0 %v1015
    %v1017 = vpop.xlane.xlu0 %1016
    %v1018 = vsel %vm108, %v978, 0.0
    %1019 = vadd.xlane.f32.xlu0 %v1018
    %v1020 = vpop.xlane.xlu0 %1019
    %v1021 = vsel %vm108, %v980, 0.0
    %1022 = vadd.xlane.f32.xlu0 %v1021
    %v1023 = vpop.xlane.xlu0 %1022
    %v1024 = vsel %vm108, %v982, 0.0
    %1025 = vadd.xlane.f32.xlu0 %v1024
    %v1026 = vpop.xlane.xlu0 %1025
    %v1027 = vsel %vm108, %v984, 0.0
    %1028 = vadd.xlane.f32.xlu0 %v1027
    %v1029 = vpop.xlane.xlu0 %1028
    %v1030 = vsel %vm108, %v986, 0.0
    %1031 = vadd.xlane.f32.xlu0 %v1030
    %v1032 = vpop.xlane.xlu0 %1031
    %v1033 = vsel %vm108, %v988, 0.0
    %1034 = vadd.xlane.f32.xlu0 %v1033
    %v1035 = vpop.xlane.xlu0 %1034
    %v1036 = vsel %vm108, %v990, 0.0
    %1037 = vadd.xlane.f32.xlu0 %v1036
    %v1038 = vpop.xlane.xlu0 %1037
    %v1039 = vrcp.pop %v993
    %v1040 = vrcp.pop %v996
    %v1041 = vrcp.pop %v999
    %v1042 = vrcp.pop %v1002
    %v1043 = vrcp.pop %v1005
    %v1044 = vrcp.pop %v1008
    %v1045 = vrcp.pop %v1011
    %v1046 = vrcp.pop %v1014
    %v1047 = vrcp.pop %v1017
    %v1048 = vrcp.pop %v1020
    %v1049 = vrcp.pop %v1023
    %v1050 = vrcp.pop %v1026
    %v1051 = vrcp.pop %v1029
    %v1052 = vrcp.pop %v1032
    %v1053 = vrcp.pop %v1035
    %v1054 = vrcp.pop %v1038
    %v1055 = vmul.f32 %v960, %v1039
    %v1056 = vmul.f32 %v962, %v1040
    %v1057 = vmul.f32 %v964, %v1041
    %v1058 = vmul.f32 %v966, %v1042
    %v1059 = vmul.f32 %v968, %v1043
    %v1060 = vmul.f32 %v970, %v1044
    %v1061 = vmul.f32 %v972, %v1045
    %v1062 = vmul.f32 %v974, %v1046
    %v1063 = vmul.f32 %v976, %v1047
    %v1064 = vmul.f32 %v978, %v1048
    %v1065 = vmul.f32 %v980, %v1049
    %v1066 = vmul.f32 %v982, %v1050
    %v1067 = vmul.f32 %v984, %v1051
    %v1068 = vmul.f32 %v986, %v1052
    %v1069 = vmul.f32 %v988, %v1053
    %v1070 = vmul.f32 %v990, %v1054
    %v1072 = vsel %vm108, %v1055, 0
    %v1075 = vsel %vm108, %v1056, 0
    %v1078 = vsel %vm108, %v1057, 0
    %v1081 = vsel %vm108, %v1058, 0
    %v1084 = vsel %vm108, %v1059, 0
    %v1087 = vsel %vm108, %v1060, 0
    %v1090 = vsel %vm108, %v1061, 0
    %v1093 = vsel %vm108, %v1062, 0
    %v1096 = vsel %vm108, %v1063, 0
    %v1099 = vsel %vm108, %v1064, 0
    %v1102 = vsel %vm108, %v1065, 0
    %v1105 = vsel %vm108, %v1066, 0
    %v1108 = vsel %vm108, %v1067, 0
    %v1111 = vsel %vm108, %v1068, 0
    %v1114 = vsel %vm108, %v1069, 0
    %v1117 = vsel %vm108, %v1070, 0
    %1119 = vmatprep.subr.mxu0 0.0
    %1120 = vmatpush1.msra.mxu0 0.0
    %1121 = vmatprep.subr.mxu0 0.0
    %1122 = vmatpush1.msra.mxu0 0.0
    %1123 = vmatprep.subr.mxu0 0.0
    %1124 = vmatpush1.msra.mxu0 0.0
    %1125 = vmatprep.subr.mxu0 0.0
    %1126 = vmatpush1.msra.mxu0 0.0
    %1127 = vmatprep.subr.mxu0 0.0
    %1128 = vmatpush1.msra.mxu0 0.0
    %1129 = vmatprep.subr.mxu0 0.0
    %1130 = vmatpush1.msra.mxu0 0.0
    %1131 = vmatprep.subr.mxu0 0.0
    %1132 = vmatpush1.msra.mxu0 0.0
    %1133 = vmatprep.subr.mxu0 0.0
    %1134 = vmatpush1.msra.mxu0 0.0
    %1135 = vmatprep.subr.mxu0 0.0
    %1136 = vmatpush1.msra.mxu0 0.0
    %1137 = vmatprep.subr.mxu0 0.0
    %1138 = vmatpush1.msra.mxu0 0.0
    %1139 = vmatprep.subr.mxu0 0.0
    %1140 = vmatpush1.msra.mxu0 0.0
    %1141 = vmatprep.subr.mxu0 0.0
    %1142 = vmatpush1.msra.mxu0 0.0
    %1143 = vmatprep.subr.mxu0 0.0
    %1144 = vmatpush1.msra.mxu0 0.0
    %1145 = vmatprep.subr.mxu0 0.0
    %1146 = vmatpush1.msra.mxu0 0.0
    %1147 = vmatprep.subr.mxu0 0.0
    %1148 = vmatpush1.msra.mxu0 %v452
    %1149 = vmatprep.subr.mxu0 0.0
    %1150 = vmatpush1.msra.mxu0 %v447
    %1151 = vmatprep.subr.mxu0 0.0
    %1152 = vmatpush2.msra.mxu0 0.0
    %1153 = vmatprep.subr.mxu0 0.0
    %1154 = vmatpush2.msra.mxu0 0.0
    %1155 = vmatprep.subr.mxu0 0.0
    %1156 = vmatpush2.msra.mxu0 0.0
    %1157 = vmatprep.subr.mxu0 0.0
    %1158 = vmatpush2.msra.mxu0 0.0
    %1159 = vmatprep.subr.mxu0 0.0
    %1160 = vmatpush2.msra.mxu0 0.0
    %1161 = vmatprep.subr.mxu0 0.0
    %1162 = vmatpush2.msra.mxu0 0.0
    %1163 = vmatprep.subr.mxu0 0.0
    %1164 = vmatpush2.msra.mxu0 0.0
    %1165 = vmatprep.subr.mxu0 0.0
    %1166 = vmatpush2.msra.mxu0 0.0
    %1167 = vmatprep.subr.mxu0 0.0
    %1168 = vmatpush2.msra.mxu0 0.0
    %1169 = vmatprep.subr.mxu0 0.0
    %1170 = vmatpush2.msra.mxu0 0.0
    %1171 = vmatprep.subr.mxu0 0.0
    %1172 = vmatpush2.msra.mxu0 0.0
    %1173 = vmatprep.subr.mxu0 0.0
    %1174 = vmatpush2.msra.mxu0 0.0
    %1175 = vmatprep.subr.mxu0 0.0
    %1176 = vmatpush2.msra.mxu0 0.0
    %1177 = vmatprep.subr.mxu0 0.0
    %1178 = vmatpush2.msra.mxu0 0.0
    %1179 = vmatprep.subr.mxu0 0.0
    %1180 = vmatpush2.msra.mxu0 0.0
    %1181 = vmatprep.subr.mxu0 0.0
    %1182 = vmatpush2.msra.mxu0 0.0
    %1183 = vmatprep.mubr.f32.mxu0 0.0
    %1184 = vmatmul.mubr.f32.gmra.mxu0 %v1072
    %v1185 = vpop.f32.mrf.mxu0
    %v1186 = vadd.f32 0.0, %v1185
    %v1187 = vpop.f32.mrf.mxu0
    %1188 = vmatprep.mubr.f32.mxu0 0.0
    %1189 = vmatmul.mubr.f32.gmra.mxu0 %v1075
    %v1190 = vpop.f32.mrf.mxu0
    %v1191 = vadd.f32 0.0, %v1190
    %v1192 = vpop.f32.mrf.mxu0
    %1193 = vmatprep.mubr.f32.mxu0 0.0
    %1194 = vmatmul.mubr.f32.gmra.mxu0 %v1078
    %v1195 = vpop.f32.mrf.mxu0
    %v1196 = vadd.f32 0.0, %v1195
    %v1197 = vpop.f32.mrf.mxu0
    %1198 = vmatprep.mubr.f32.mxu0 0.0
    %1199 = vmatmul.mubr.f32.gmra.mxu0 %v1081
    %v1200 = vpop.f32.mrf.mxu0
    %v1201 = vadd.f32 0.0, %v1200
    %v1202 = vpop.f32.mrf.mxu0
    %1203 = vmatprep.mubr.f32.mxu0 0.0
    %1204 = vmatmul.mubr.f32.gmra.mxu0 %v1084
    %v1205 = vpop.f32.mrf.mxu0
    %v1206 = vadd.f32 0.0, %v1205
    %v1207 = vpop.f32.mrf.mxu0
    %1208 = vmatprep.mubr.f32.mxu0 0.0
    %1209 = vmatmul.mubr.f32.gmra.mxu0 %v1087
    %v1210 = vpop.f32.mrf.mxu0
    %v1211 = vadd.f32 0.0, %v1210
    %v1212 = vpop.f32.mrf.mxu0
    %1213 = vmatprep.mubr.f32.mxu0 0.0
    %1214 = vmatmul.mubr.f32.gmra.mxu0 %v1090
    %v1215 = vpop.f32.mrf.mxu0
    %v1216 = vadd.f32 0.0, %v1215
    %v1217 = vpop.f32.mrf.mxu0
    %1218 = vmatprep.mubr.f32.mxu0 0.0
    %1219 = vmatmul.mubr.f32.gmra.mxu0 %v1093
    %v1220 = vpop.f32.mrf.mxu0
    %v1221 = vadd.f32 0.0, %v1220
    %v1222 = vpop.f32.mrf.mxu0
    %1223 = vmatprep.mubr.f32.mxu0 0.0
    %1224 = vmatmul.mubr.f32.gmra.mxu0 %v1096
    %v1225 = vpop.f32.mrf.mxu0
    %v1226 = vadd.f32 0.0, %v1225
    %v1227 = vpop.f32.mrf.mxu0
    %1228 = vmatprep.mubr.f32.mxu0 0.0
    %1229 = vmatmul.mubr.f32.gmra.mxu0 %v1099
    %v1230 = vpop.f32.mrf.mxu0
    %v1231 = vadd.f32 0.0, %v1230
    %v1232 = vpop.f32.mrf.mxu0
    %1233 = vmatprep.mubr.f32.mxu0 0.0
    %1234 = vmatmul.mubr.f32.gmra.mxu0 %v1102
    %v1235 = vpop.f32.mrf.mxu0
    %v1236 = vadd.f32 0.0, %v1235
    %v1237 = vpop.f32.mrf.mxu0
    %1238 = vmatprep.mubr.f32.mxu0 0.0
    %1239 = vmatmul.mubr.f32.gmra.mxu0 %v1105
    %v1240 = vpop.f32.mrf.mxu0
    %v1241 = vadd.f32 0.0, %v1240
    %v1242 = vpop.f32.mrf.mxu0
    %1243 = vmatprep.mubr.f32.mxu0 0.0
    %1244 = vmatmul.mubr.f32.gmra.mxu0 %v1108
    %v1245 = vpop.f32.mrf.mxu0
    %v1246 = vadd.f32 0.0, %v1245
    %v1247 = vpop.f32.mrf.mxu0
    %1248 = vmatprep.mubr.f32.mxu0 0.0
    %1249 = vmatmul.mubr.f32.gmra.mxu0 %v1111
    %v1250 = vpop.f32.mrf.mxu0
    %v1251 = vadd.f32 0.0, %v1250
    %v1252 = vpop.f32.mrf.mxu0
    %1253 = vmatprep.mubr.f32.mxu0 0.0
    %1254 = vmatmul.mubr.f32.gmra.mxu0 %v1114
    %v1255 = vpop.f32.mrf.mxu0
    %v1256 = vadd.f32 0.0, %v1255
    %v1257 = vpop.f32.mrf.mxu0
    %1258 = vmatprep.mubr.f32.mxu0 0.0
    %1259 = vmatmul.mubr.f32.gmra.mxu0 %v1117
    %v1260 = vpop.f32.mrf.mxu0
    %v1261 = vadd.f32 0.0, %v1260
    %v1262 = vpop.f32.mrf.mxu0
    %1263 = vdwg.mxu0
    %v1264 = vmul.f32 %v1186, %v83
    %v1265 = vmul.f32 %v1191, %v84
    %v1266 = vmul.f32 %v1196, %v85
    %v1267 = vmul.f32 %v1201, %v86
    %v1268 = vmul.f32 %v1206, %v87
    %v1269 = vmul.f32 %v1211, %v88
    %v1270 = vmul.f32 %v1216, %v89
    %v1271 = vmul.f32 %v1221, %v90
    %v1272 = vmul.f32 %v1226, %v91
    %v1273 = vmul.f32 %v1231, %v92
    %v1274 = vmul.f32 %v1236, %v93
    %v1275 = vmul.f32 %v1241, %v94
    %v1276 = vmul.f32 %v1246, %v95
    %v1277 = vmul.f32 %v1251, %v96
    %v1278 = vmul.f32 %v1256, %v97
    %v1279 = vmul.f32 %v1261, %v98
    %v1280 = vld [vmem:[%s4] sm:$0xff]
    %v1281 = vld [vmem:[%s4 + $0x8] sm:$0xff]
    %1282 = vmatprep.subr.mxu0 0.0
    %1283 = vmatpush1.msra.mxu0 %v1279
    %1284 = vmatprep.subr.mxu0 0.0
    %1285 = vmatpush1.msra.mxu0 %v1278
    %1286 = vmatprep.subr.mxu0 0.0
    %1287 = vmatpush1.msra.mxu0 %v1277
    %1288 = vmatprep.subr.mxu0 0.0
    %1289 = vmatpush1.msra.mxu0 %v1276
    %1290 = vmatprep.subr.mxu0 0.0
    %1291 = vmatpush1.msra.mxu0 %v1275
    %1292 = vmatprep.subr.mxu0 0.0
    %1293 = vmatpush1.msra.mxu0 %v1274
    %1294 = vmatprep.subr.mxu0 0.0
    %1295 = vmatpush1.msra.mxu0 %v1273
    %1296 = vmatprep.subr.mxu0 0.0
    %1297 = vmatpush1.msra.mxu0 %v1272
    %1298 = vmatprep.subr.mxu0 0.0
    %1299 = vmatpush1.msra.mxu0 %v1271
    %1300 = vmatprep.subr.mxu0 0.0
    %1301 = vmatpush1.msra.mxu0 %v1270
    %1302 = vmatprep.subr.mxu0 0.0
    %1303 = vmatpush1.msra.mxu0 %v1269
    %1304 = vmatprep.subr.mxu0 0.0
    %1305 = vmatpush1.msra.mxu0 %v1268
    %1306 = vmatprep.subr.mxu0 0.0
    %1307 = vmatpush1.msra.mxu0 %v1267
    %1308 = vmatprep.subr.mxu0 0.0
    %1309 = vmatpush1.msra.mxu0 %v1266
    %1310 = vmatprep.subr.mxu0 0.0
    %1311 = vmatpush1.msra.mxu0 %v1265
    %1312 = vmatprep.subr.mxu0 0.0
    %1313 = vmatpush1.msra.mxu0 %v1264
    %1314 = vmatprep.subr.mxu0 0.0
    %1315 = vmatpush2.msra.mxu0 0.0
    %1316 = vmatprep.subr.mxu0 0.0
    %1317 = vmatpush2.msra.mxu0 0.0
    %1318 = vmatprep.subr.mxu0 0.0
    %1319 = vmatpush2.msra.mxu0 0.0
    %1320 = vmatprep.subr.mxu0 0.0
    %1321 = vmatpush2.msra.mxu0 0.0
    %1322 = vmatprep.subr.mxu0 0.0
    %1323 = vmatpush2.msra.mxu0 0.0
    %1324 = vmatprep.subr.mxu0 0.0
    %1325 = vmatpush2.msra.mxu0 0.0
    %1326 = vmatprep.subr.mxu0 0.0
    %1327 = vmatpush2.msra.mxu0 0.0
    %1328 = vmatprep.subr.mxu0 0.0
    %1329 = vmatpush2.msra.mxu0 0.0
    %1330 = vmatprep.subr.mxu0 0.0
    %1331 = vmatpush2.msra.mxu0 0.0
    %1332 = vmatprep.subr.mxu0 0.0
    %1333 = vmatpush2.msra.mxu0 0.0
    %1334 = vmatprep.subr.mxu0 0.0
    %1335 = vmatpush2.msra.mxu0 0.0
    %1336 = vmatprep.subr.mxu0 0.0
    %1337 = vmatpush2.msra.mxu0 0.0
    %1338 = vmatprep.subr.mxu0 0.0
    %1339 = vmatpush2.msra.mxu0 0.0
    %1340 = vmatprep.subr.mxu0 0.0
    %1341 = vmatpush2.msra.mxu0 0.0
    %1342 = vmatprep.subr.mxu0 0.0
    %1343 = vmatpush2.msra.mxu0 0.0
    %1344 = vmatprep.subr.mxu0 0.0
    %1345 = vmatpush2.msra.mxu0 0.0
    %1346 = vmatprep.mubr.f32.mxu0 0.0
    %1347 = vmatmul.mubr.f32.gmra.mxu0 %v1280
    %v1348 = vpop.f32.mrf.mxu0
    %v1349 = vadd.f32 0.0, %v1348
    %v1350 = vpop.f32.mrf.mxu0
    %1351 = vmatprep.mubr.f32.mxu0 0.0
    %1352 = vmatmul.mubr.f32.gmra.mxu0 %v1281
    %v1353 = vpop.f32.mrf.mxu0
    %v1354 = vadd.f32 0.0, %v1353
    %v1355 = vpop.f32.mrf.mxu0
    %1356 = vdwg.mxu0
    %v1357 = vld [vmem:[%s13] sm:$0xff]
    %v1358 = vld [vmem:[%s13 + $0x8] sm:$0xff]
    %v1359 = vld [vmem:[%s13 + $0x10] sm:$0xff]
    %v1360 = vld [vmem:[%s13 + $0x18] sm:$0xff]
    %v1361 = vld [vmem:[%s14] sm:$0x1]
    %v1363 = vlaneseq
    %v1364 = vshrl.u32 %v1363, 7
    %v1365 = vsub.s32 0, %v1364
    %v1366 = vrot.slane %v1361, %v1365
    %v1369 = vsel %vm201, %v1349, 0
    %v1372 = vsel %vm201, %v1354, 0
    %1374 = vmatprep.subr.mxu0 0.0
    %1375 = vmatpush1.msra.mxu0 0.0
    %1376 = vmatprep.subr.mxu0 0.0
    %1377 = vmatpush1.msra.mxu0 0.0
    %1378 = vmatprep.subr.mxu0 0.0
    %1379 = vmatpush1.msra.mxu0 0.0
    %1380 = vmatprep.subr.mxu0 0.0
    %1381 = vmatpush1.msra.mxu0 0.0
    %1382 = vmatprep.subr.mxu0 0.0
    %1383 = vmatpush1.msra.mxu0 0.0
    %1384 = vmatprep.subr.mxu0 0.0
    %1385 = vmatpush1.msra.mxu0 0.0
    %1386 = vmatprep.subr.mxu0 0.0
    %1387 = vmatpush1.msra.mxu0 0.0
    %1388 = vmatprep.subr.mxu0 0.0
    %1389 = vmatpush1.msra.mxu0 0.0
    %1390 = vmatprep.subr.mxu0 0.0
    %1391 = vmatpush1.msra.mxu0 0.0
    %1392 = vmatprep.subr.mxu0 0.0
    %1393 = vmatpush1.msra.mxu0 0.0
    %1394 = vmatprep.subr.mxu0 0.0
    %1395 = vmatpush1.msra.mxu0 0.0
    %1396 = vmatprep.subr.mxu0 0.0
    %1397 = vmatpush1.msra.mxu0 0.0
    %1398 = vmatprep.subr.mxu0 0.0
    %1399 = vmatpush1.msra.mxu0 %v1360
    %1400 = vmatprep.subr.mxu0 0.0
    %1401 = vmatpush1.msra.mxu0 %v1359
    %1402 = vmatprep.subr.mxu0 0.0
    %1403 = vmatpush1.msra.mxu0 %v1358
    %1404 = vmatprep.subr.mxu0 0.0
    %1405 = vmatpush1.msra.mxu0 %v1357
    %1406 = vmatprep.subr.mxu0 0.0
    %1407 = vmatpush2.msra.mxu0 0.0
    %1408 = vmatprep.subr.mxu0 0.0
    %1409 = vmatpush2.msra.mxu0 0.0
    %1410 = vmatprep.subr.mxu0 0.0
    %1411 = vmatpush2.msra.mxu0 0.0
    %1412 = vmatprep.subr.mxu0 0.0
    %1413 = vmatpush2.msra.mxu0 0.0
    %1414 = vmatprep.subr.mxu0 0.0
    %1415 = vmatpush2.msra.mxu0 0.0
    %1416 = vmatprep.subr.mxu0 0.0
    %1417 = vmatpush2.msra.mxu0 0.0
    %1418 = vmatprep.subr.mxu0 0.0
    %1419 = vmatpush2.msra.mxu0 0.0
    %1420 = vmatprep.subr.mxu0 0.0
    %1421 = vmatpush2.msra.mxu0 0.0
    %1422 = vmatprep.subr.mxu0 0.0
    %1423 = vmatpush2.msra.mxu0 0.0
    %1424 = vmatprep.subr.mxu0 0.0
    %1425 = vmatpush2.msra.mxu0 0.0
    %1426 = vmatprep.subr.mxu0 0.0
    %1427 = vmatpush2.msra.mxu0 0.0
    %1428 = vmatprep.subr.mxu0 0.0
    %1429 = vmatpush2.msra.mxu0 0.0
    %1430 = vmatprep.subr.mxu0 0.0
    %1431 = vmatpush2.msra.mxu0 0.0
    %1432 = vmatprep.subr.mxu0 0.0
    %1433 = vmatpush2.msra.mxu0 0.0
    %1434 = vmatprep.subr.mxu0 0.0
    %1435 = vmatpush2.msra.mxu0 0.0
    %1436 = vmatprep.subr.mxu0 0.0
    %1437 = vmatpush2.msra.mxu0 0.0
    %1438 = vmatprep.mubr.f32.mxu0 0.0
    %1439 = vmatmul.mubr.f32.gmra.mxu0 %v1369
    %v1440 = vpop.f32.mrf.mxu0
    %v1441 = vadd.f32 %v1366, %v1440
    %v1442 = vpop.f32.mrf.mxu0
    %1443 = vmatprep.mubr.f32.mxu0 0.0
    %1444 = vmatmul.mubr.f32.gmra.mxu0 %v1372
    %v1445 = vpop.f32.mrf.mxu0
    %v1446 = vadd.f32 %v1366, %v1445
    %v1447 = vpop.f32.mrf.mxu0
    %1448 = vdwg.mxu0
    %v1449 = vadd.f32 %v182, %v1441
    %v1450 = vadd.f32 %v187, %v1446
    %v1451 = vld [vmem:[%s15] sm:$0x1]
    %v1452 = vld [vmem:[%s16] sm:$0x1]
    %v1453 = vsel %vm201, %v1449, 0.0
    %1454 = vadd.xlane.f32.xlu0 %v1453
    %v1455 = vpop.xlane.xlu0 %1454
    %v1456 = vsel %vm201, %v1450, 0.0
    %1457 = vadd.xlane.f32.xlu0 %v1456
    %v1458 = vpop.xlane.xlu0 %1457
    %v1459 = vrcp.pop 32.0
    %v1460 = vmul.f32 %v1455, %v1459
    %v1461 = vmul.f32 %v1458, %v1459
    %v1462 = vsub.f32 %v1449, %v1460
    %v1463 = vsub.f32 %v1450, %v1461
    %v1464 = vmul.f32 %v1462, %v1462
    %v1465 = vmul.f32 %v1463, %v1463
    %v1466 = vsel %vm201, %v1464, 0.0
    %1467 = vadd.xlane.f32.xlu0 %v1466
    %v1468 = vpop.xlane.xlu0 %1467
    %v1469 = vsel %vm201, %v1465, 0.0
    %1470 = vadd.xlane.f32.xlu0 %v1469
    %v1471 = vpop.xlane.xlu0 %1470
    %v1472 = vmul.f32 %v1468, %v1459
    %v1473 = vmul.f32 %v1471, %v1459
    %v1474 = vadd.f32 %v1472, 1e-05
    %v1475 = vadd.f32 %v1473, 1e-05
    %v1476 = vrsqrt.pop %v1474
    %v1477 = vrsqrt.pop %v1475
    %v1478 = vmul.f32 %v1462, %v1476
    %v1479 = vmul.f32 %v1463, %v1477
    %v1481 = vlaneseq
    %v1482 = vshrl.u32 %v1481, 7
    %v1483 = vsub.s32 0, %v1482
    %v1484 = vrot.slane %v1451, %v1483
    %v1486 = vmul.f32 %v1478, %v1484
    %v1487 = vmul.f32 %v1479, %v1484
    %v1489 = vlaneseq
    %v1490 = vshrl.u32 %v1489, 7
    %v1491 = vsub.s32 0, %v1490
    %v1492 = vrot.slane %v1452, %v1491
    %v1494 = vadd.f32 %v1486, %v1492
    %v1495 = vadd.f32 %v1487, %v1492
    %v1496 = vld [vmem:[%s17] sm:$0xff]
    %v1497 = vld [vmem:[%s17 + $0x8] sm:$0xff]
    %v1498 = vld [vmem:[%s17 + $0x10] sm:$0xff]
    %v1499 = vld [vmem:[%s17 + $0x18] sm:$0xff]
    %v1500 = vld [vmem:[%s17 + $0x20] sm:$0xff]
    %v1501 = vld [vmem:[%s17 + $0x28] sm:$0xff]
    %v1502 = vld [vmem:[%s17 + $0x30] sm:$0xff]
    %v1503 = vld [vmem:[%s17 + $0x38] sm:$0xff]
    %v1504 = vld [vmem:[%s18] sm:$0x3]
    %v1506 = vlaneseq
    %v1507 = vshrl.u32 %v1506, 7
    %v1508 = vsub.s32 0, %v1507
    %v1509 = vrot.slane %v1504, %v1508
    %v1510 = vlaneseq
    %v1511 = vshrl.u32 %v1510, 7
    %v1512 = vsub.s32 1, %v1511
    %v1513 = vrot.slane %v1504, %v1512
    %v1517 = vsel %vm201, %v1494, 0
    %v1520 = vsel %vm201, %v1495, 0
    %1522 = vmatprep.subr.mxu0 0.0
    %1523 = vmatpush1.msra.mxu0 0.0
    %1524 = vmatprep.subr.mxu0 0.0
    %1525 = vmatpush1.msra.mxu0 0.0
    %1526 = vmatprep.subr.mxu0 0.0
    %1527 = vmatpush1.msra.mxu0 0.0
    %1528 = vmatprep.subr.mxu0 0.0
    %1529 = vmatpush1.msra.mxu0 0.0
    %1530 = vmatprep.subr.mxu0 0.0
    %1531 = vmatpush1.msra.mxu0 0.0
    %1532 = vmatprep.subr.mxu0 0.0
    %1533 = vmatpush1.msra.mxu0 0.0
    %1534 = vmatprep.subr.mxu0 0.0
    %1535 = vmatpush1.msra.mxu0 0.0
    %1536 = vmatprep.subr.mxu0 0.0
    %1537 = vmatpush1.msra.mxu0 0.0
    %1538 = vmatprep.subr.mxu0 0.0
    %1539 = vmatpush1.msra.mxu0 0.0
    %1540 = vmatprep.subr.mxu0 0.0
    %1541 = vmatpush1.msra.mxu0 0.0
    %1542 = vmatprep.subr.mxu0 0.0
    %1543 = vmatpush1.msra.mxu0 0.0
    %1544 = vmatprep.subr.mxu0 0.0
    %1545 = vmatpush1.msra.mxu0 0.0
    %1546 = vmatprep.subr.mxu0 %v1503
    %1547 = vmatpush1.msra.mxu0 %v1502
    %1548 = vmatprep.subr.mxu0 %v1501
    %1549 = vmatpush1.msra.mxu0 %v1500
    %1550 = vmatprep.subr.mxu0 %v1499
    %1551 = vmatpush1.msra.mxu0 %v1498
    %1552 = vmatprep.subr.mxu0 %v1497
    %1553 = vmatpush1.msra.mxu0 %v1496
    %1554 = vmatprep.subr.mxu0 0.0
    %1555 = vmatpush2.msra.mxu0 0.0
    %1556 = vmatprep.subr.mxu0 0.0
    %1557 = vmatpush2.msra.mxu0 0.0
    %1558 = vmatprep.subr.mxu0 0.0
    %1559 = vmatpush2.msra.mxu0 0.0
    %1560 = vmatprep.subr.mxu0 0.0
    %1561 = vmatpush2.msra.mxu0 0.0
    %1562 = vmatprep.subr.mxu0 0.0
    %1563 = vmatpush2.msra.mxu0 0.0
    %1564 = vmatprep.subr.mxu0 0.0
    %1565 = vmatpush2.msra.mxu0 0.0
    %1566 = vmatprep.subr.mxu0 0.0
    %1567 = vmatpush2.msra.mxu0 0.0
    %1568 = vmatprep.subr.mxu0 0.0
    %1569 = vmatpush2.msra.mxu0 0.0
    %1570 = vmatprep.subr.mxu0 0.0
    %1571 = vmatpush2.msra.mxu0 0.0
    %1572 = vmatprep.subr.mxu0 0.0
    %1573 = vmatpush2.msra.mxu0 0.0
    %1574 = vmatprep.subr.mxu0 0.0
    %1575 = vmatpush2.msra.mxu0 0.0
    %1576 = vmatprep.subr.mxu0 0.0
    %1577 = vmatpush2.msra.mxu0 0.0
    %1578 = vmatprep.subr.mxu0 0.0
    %1579 = vmatpush2.msra.mxu0 0.0
    %1580 = vmatprep.subr.mxu0 0.0
    %1581 = vmatpush2.msra.mxu0 0.0
    %1582 = vmatprep.subr.mxu0 0.0
    %1583 = vmatpush2.msra.mxu0 0.0
    %1584 = vmatprep.subr.mxu0 0.0
    %1585 = vmatpush2.msra.mxu0 0.0
    %1586 = vmatprep.mubr.f32.mxu0 0.0
    %1587 = vmatmul.mubr.f32.gmra.mxu0 %v1517
    %v1588 = vpop.f32.mrf.mxu0
    %v1589 = vadd.f32 %v1509, %v1588
    %v1590 = vpop.f32.mrf.mxu0
    %v1591 = vadd.f32 %v1513, %v1590
    %1592 = vmatprep.mubr.f32.mxu0 0.0
    %1593 = vmatmul.mubr.f32.gmra.mxu0 %v1520
    %v1594 = vpop.f32.mrf.mxu0
    %v1595 = vadd.f32 %v1509, %v1594
    %v1596 = vpop.f32.mrf.mxu0
    %v1597 = vadd.f32 %v1513, %v1596
    %1598 = vdwg.mxu0
    %v1599 = vmax.f32 %v1589, 0.0
    %v1600 = vmax.f32 %v1591, 0.0
    %v1601 = vmax.f32 %v1595, 0.0
    %v1602 = vmax.f32 %v1597, 0.0
    %v1603 = vld [vmem:[%s19] sm:$0xff]
    %v1604 = vld [vmem:[%s19 + $0x8] sm:$0xff]
    %v1605 = vld [vmem:[%s19 + $0x10] sm:$0xff]
    %v1606 = vld [vmem:[%s19 + $0x18] sm:$0xff]
    %v1607 = vld [vmem:[%s19 + $0x20] sm:$0xff]
    %v1608 = vld [vmem:[%s19 + $0x28] sm:$0xff]
    %v1609 = vld [vmem:[%s19 + $0x30] sm:$0xff]
    %v1610 = vld [vmem:[%s19 + $0x38] sm:$0xff]
    %v1611 = vld [vmem:[%s19 + $0x40] sm:$0xff]
    %v1612 = vld [vmem:[%s19 + $0x48] sm:$0xff]
    %v1613 = vld [vmem:[%s19 + $0x50] sm:$0xff]
    %v1614 = vld [vmem:[%s19 + $0x58] sm:$0xff]
    %v1615 = vld [vmem:[%s19 + $0x60] sm:$0xff]
    %v1616 = vld [vmem:[%s19 + $0x68] sm:$0xff]
    %v1617 = vld [vmem:[%s19 + $0x70] sm:$0xff]
    %v1618 = vld [vmem:[%s19 + $0x78] sm:$0xff]
    %v1619 = vld [vmem:[%s19 + $0x80] sm:$0xff]
    %v1620 = vld [vmem:[%s19 + $0x88] sm:$0xff]
    %v1621 = vld [vmem:[%s19 + $0x90] sm:$0xff]
    %v1622 = vld [vmem:[%s19 + $0x98] sm:$0xff]
    %v1623 = vld [vmem:[%s19 + $0xa0] sm:$0xff]
    %v1624 = vld [vmem:[%s19 + $0xa8] sm:$0xff]
    %v1625 = vld [vmem:[%s19 + $0xb0] sm:$0xff]
    %v1626 = vld [vmem:[%s19 + $0xb8] sm:$0xff]
    %v1627 = vld [vmem:[%s19 + $0xc0] sm:$0xff]
    %v1628 = vld [vmem:[%s19 + $0xc8] sm:$0xff]
    %v1629 = vld [vmem:[%s19 + $0xd0] sm:$0xff]
    %v1630 = vld [vmem:[%s19 + $0xd8] sm:$0xff]
    %v1631 = vld [vmem:[%s19 + $0xe0] sm:$0xff]
    %v1632 = vld [vmem:[%s19 + $0xe8] sm:$0xff]
    %v1633 = vld [vmem:[%s19 + $0xf0] sm:$0xff]
    %v1634 = vld [vmem:[%s19 + $0xf8] sm:$0xff]
    %v1635 = vld [vmem:[%s20] sm:$0x1]
    %v1637 = vlaneseq
    %v1638 = vshrl.u32 %v1637, 7
    %v1639 = vsub.s32 0, %v1638
    %v1640 = vrot.slane %v1635, %v1639
    %1642 = vmatprep.subr.mxu0 0.0
    %1643 = vmatpush1.msra.mxu0 %v1618
    %1644 = vmatprep.subr.mxu0 0.0
    %1645 = vmatpush1.msra.mxu0 %v1617
    %1646 = vmatprep.subr.mxu0 0.0
    %1647 = vmatpush1.msra.mxu0 %v1616
    %1648 = vmatprep.subr.mxu0 0.0
    %1649 = vmatpush1.msra.mxu0 %v1615
    %1650 = vmatprep.subr.mxu0 0.0
    %1651 = vmatpush1.msra.mxu0 %v1614
    %1652 = vmatprep.subr.mxu0 0.0
    %1653 = vmatpush1.msra.mxu0 %v1613
    %1654 = vmatprep.subr.mxu0 0.0
    %1655 = vmatpush1.msra.mxu0 %v1612
    %1656 = vmatprep.subr.mxu0 0.0
    %1657 = vmatpush1.msra.mxu0 %v1611
    %1658 = vmatprep.subr.mxu0 0.0
    %1659 = vmatpush1.msra.mxu0 %v1610
    %1660 = vmatprep.subr.mxu0 0.0
    %1661 = vmatpush1.msra.mxu0 %v1609
    %1662 = vmatprep.subr.mxu0 0.0
    %1663 = vmatpush1.msra.mxu0 %v1608
    %1664 = vmatprep.subr.mxu0 0.0
    %1665 = vmatpush1.msra.mxu0 %v1607
    %1666 = vmatprep.subr.mxu0 0.0
    %1667 = vmatpush1.msra.mxu0 %v1606
    %1668 = vmatprep.subr.mxu0 0.0
    %1669 = vmatpush1.msra.mxu0 %v1605
    %1670 = vmatprep.subr.mxu0 0.0
    %1671 = vmatpush1.msra.mxu0 %v1604
    %1672 = vmatprep.subr.mxu0 0.0
    %1673 = vmatpush1.msra.mxu0 %v1603
    %1674 = vmatprep.subr.mxu0 0.0
    %1675 = vmatpush2.msra.mxu0 %v1634
    %1676 = vmatprep.subr.mxu0 0.0
    %1677 = vmatpush2.msra.mxu0 %v1633
    %1678 = vmatprep.subr.mxu0 0.0
    %1679 = vmatpush2.msra.mxu0 %v1632
    %1680 = vmatprep.subr.mxu0 0.0
    %1681 = vmatpush2.msra.mxu0 %v1631
    %1682 = vmatprep.subr.mxu0 0.0
    %1683 = vmatpush2.msra.mxu0 %v1630
    %1684 = vmatprep.subr.mxu0 0.0
    %1685 = vmatpush2.msra.mxu0 %v1629
    %1686 = vmatprep.subr.mxu0 0.0
    %1687 = vmatpush2.msra.mxu0 %v1628
    %1688 = vmatprep.subr.mxu0 0.0
    %1689 = vmatpush2.msra.mxu0 %v1627
    %1690 = vmatprep.subr.mxu0 0.0
    %1691 = vmatpush2.msra.mxu0 %v1626
    %1692 = vmatprep.subr.mxu0 0.0
    %1693 = vmatpush2.msra.mxu0 %v1625
    %1694 = vmatprep.subr.mxu0 0.0
    %1695 = vmatpush2.msra.mxu0 %v1624
    %1696 = vmatprep.subr.mxu0 0.0
    %1697 = vmatpush2.msra.mxu0 %v1623
    %1698 = vmatprep.subr.mxu0 0.0
    %1699 = vmatpush2.msra.mxu0 %v1622
    %1700 = vmatprep.subr.mxu0 0.0
    %1701 = vmatpush2.msra.mxu0 %v1621
    %1702 = vmatprep.subr.mxu0 0.0
    %1703 = vmatpush2.msra.mxu0 %v1620
    %1704 = vmatprep.subr.mxu0 0.0
    %1705 = vmatpush2.msra.mxu0 %v1619
    %1706 = vmatprep.mubr.f32.mxu0 %v1600
    %1707 = vmatmul.mubr.f32.gmra.mxu0 %v1599
    %v1708 = vpop.f32.mrf.mxu0
    %v1709 = vadd.f32 %v1640, %v1708
    %v1710 = vpop.f32.mrf.mxu0
    %1711 = vmatprep.mubr.f32.mxu0 %v1602
    %1712 = vmatmul.mubr.f32.gmra.mxu0 %v1601
    %v1713 = vpop.f32.mrf.mxu0
    %v1714 = vadd.f32 %v1640, %v1713
    %v1715 = vpop.f32.mrf.mxu0
    %1716 = vdwg.mxu0
    %v1717 = vadd.f32 %v1494, %v1709
    %v1718 = vadd.f32 %v1495, %v1714
    %v1719 = vld [vmem:[%s21] sm:$0x1]
    %v1720 = vld [vmem:[%s22] sm:$0x1]
    %v1721 = vsel %vm201, %v1717, 0.0
    %1722 = vadd.xlane.f32.xlu0 %v1721
    %v1723 = vpop.xlane.xlu0 %1722
    %v1724 = vsel %vm201, %v1718, 0.0
    %1725 = vadd.xlane.f32.xlu0 %v1724
    %v1726 = vpop.xlane.xlu0 %1725
    %v1727 = vmul.f32 %v1723, %v1459
    %v1728 = vmul.f32 %v1726, %v1459
    %v1729 = vsub.f32 %v1717, %v1727
    %v1730 = vsub.f32 %v1718, %v1728
    %v1731 = vmul.f32 %v1729, %v1729
    %v1732 = vmul.f32 %v1730, %v1730
    %v1733 = vsel %vm201, %v1731, 0.0
    %1734 = vadd.xlane.f32.xlu0 %v1733
    %v1735 = vpop.xlane.xlu0 %1734
    %v1736 = vsel %vm201, %v1732, 0.0
    %1737 = vadd.xlane.f32.xlu0 %v1736
    %v1738 = vpop.xlane.xlu0 %1737
    %v1739 = vmul.f32 %v1735, %v1459
    %v1740 = vmul.f32 %v1738, %v1459
    %v1741 = vadd.f32 %v1739, 1e-05
    %v1742 = vadd.f32 %v1740, 1e-05
    %v1743 = vrsqrt.pop %v1741
    %v1744 = vrsqrt.pop %v1742
    %v1745 = vmul.f32 %v1729, %v1743
    %v1746 = vmul.f32 %v1730, %v1744
    %v1748 = vlaneseq
    %v1749 = vshrl.u32 %v1748, 7
    %v1750 = vsub.s32 0, %v1749
    %v1751 = vrot.slane %v1719, %v1750
    %v1753 = vmul.f32 %v1745, %v1751
    %v1754 = vmul.f32 %v1746, %v1751
    %v1756 = vlaneseq
    %v1757 = vshrl.u32 %v1756, 7
    %v1758 = vsub.s32 0, %v1757
    %v1759 = vrot.slane %v1720, %v1758
    %v1761 = vadd.f32 %v1753, %v1759
    %v1762 = vadd.f32 %v1754, %v1759
    %v1763 = vld [vmem:[%s23] sm:$0xff]
    %v1764 = vld [vmem:[%s23 + $0x8] sm:$0xff]
    %v1765 = vld [vmem:[%s23 + $0x10] sm:$0xff]
    %v1766 = vld [vmem:[%s23 + $0x18] sm:$0xff]
    %v1767 = vld [vmem:[%s24] sm:$0x1]
    %v1769 = vlaneseq
    %v1770 = vshrl.u32 %v1769, 7
    %v1771 = vsub.s32 0, %v1770
    %v1772 = vrot.slane %v1767, %v1771
    %v1775 = vsel %vm201, %v1761, 0
    %v1778 = vsel %vm201, %v1762, 0
    %1780 = vmatprep.subr.mxu0 0.0
    %1781 = vmatpush1.msra.mxu0 0.0
    %1782 = vmatprep.subr.mxu0 0.0
    %1783 = vmatpush1.msra.mxu0 0.0
    %1784 = vmatprep.subr.mxu0 0.0
    %1785 = vmatpush1.msra.mxu0 0.0
    %1786 = vmatprep.subr.mxu0 0.0
    %1787 = vmatpush1.msra.mxu0 0.0
    %1788 = vmatprep.subr.mxu0 0.0
    %1789 = vmatpush1.msra.mxu0 0.0
    %1790 = vmatprep.subr.mxu0 0.0
    %1791 = vmatpush1.msra.mxu0 0.0
    %1792 = vmatprep.subr.mxu0 0.0
    %1793 = vmatpush1.msra.mxu0 0.0
    %1794 = vmatprep.subr.mxu0 0.0
    %1795 = vmatpush1.msra.mxu0 0.0
    %1796 = vmatprep.subr.mxu0 0.0
    %1797 = vmatpush1.msra.mxu0 0.0
    %1798 = vmatprep.subr.mxu0 0.0
    %1799 = vmatpush1.msra.mxu0 0.0
    %1800 = vmatprep.subr.mxu0 0.0
    %1801 = vmatpush1.msra.mxu0 0.0
    %1802 = vmatprep.subr.mxu0 0.0
    %1803 = vmatpush1.msra.mxu0 0.0
    %1804 = vmatprep.subr.mxu0 0.0
    %1805 = vmatpush1.msra.mxu0 %v1766
    %1806 = vmatprep.subr.mxu0 0.0
    %1807 = vmatpush1.msra.mxu0 %v1765
    %1808 = vmatprep.subr.mxu0 0.0
    %1809 = vmatpush1.msra.mxu0 %v1764
    %1810 = vmatprep.subr.mxu0 0.0
    %1811 = vmatpush1.msra.mxu0 %v1763
    %1812 = vmatprep.subr.mxu0 0.0
    %1813 = vmatpush2.msra.mxu0 0.0
    %1814 = vmatprep.subr.mxu0 0.0
    %1815 = vmatpush2.msra.mxu0 0.0
    %1816 = vmatprep.subr.mxu0 0.0
    %1817 = vmatpush2.msra.mxu0 0.0
    %1818 = vmatprep.subr.mxu0 0.0
    %1819 = vmatpush2.msra.mxu0 0.0
    %1820 = vmatprep.subr.mxu0 0.0
    %1821 = vmatpush2.msra.mxu0 0.0
    %1822 = vmatprep.subr.mxu0 0.0
    %1823 = vmatpush2.msra.mxu0 0.0
    %1824 = vmatprep.subr.mxu0 0.0
    %1825 = vmatpush2.msra.mxu0 0.0
    %1826 = vmatprep.subr.mxu0 0.0
    %1827 = vmatpush2.msra.mxu0 0.0
    %1828 = vmatprep.subr.mxu0 0.0
    %1829 = vmatpush2.msra.mxu0 0.0
    %1830 = vmatprep.subr.mxu0 0.0
    %1831 = vmatpush2.msra.mxu0 0.0
    %1832 = vmatprep.subr.mxu0 0.0
    %1833 = vmatpush2.msra.mxu0 0.0
    %1834 = vmatprep.subr.mxu0 0.0
    %1835 = vmatpush2.msra.mxu0 0.0
    %1836 = vmatprep.subr.mxu0 0.0
    %1837 = vmatpush2.msra.mxu0 0.0
    %1838 = vmatprep.subr.mxu0 0.0
    %1839 = vmatpush2.msra.mxu0 0.0
    %1840 = vmatprep.subr.mxu0 0.0
    %1841 = vmatpush2.msra.mxu0 0.0
    %1842 = vmatprep.subr.mxu0 0.0
    %1843 = vmatpush2.msra.mxu0 0.0
    %1844 = vmatprep.mubr.f32.mxu0 0.0
    %1845 = vmatmul.mubr.f32.gmra.mxu0 %v1775
    %v1846 = vpop.f32.mrf.mxu0
    %v1847 = vadd.f32 %v1772, %v1846
    %v1848 = vpop.f32.mrf.mxu0
    %1849 = vmatprep.mubr.f32.mxu0 0.0
    %1850 = vmatmul.mubr.f32.gmra.mxu0 %v1778
    %v1851 = vpop.f32.mrf.mxu0
    %v1852 = vadd.f32 %v1772, %v1851
    %v1853 = vpop.f32.mrf.mxu0
    %1854 = vdwg.mxu0
    %1855 = vst [vmem:[#allocation2] sm:$0xff] %v1847
    %1856 = vst [vmem:[#allocation2 + $0x8] sm:$0xff] %v1852
    // Predicated region
    $region102: #{tpu_custom_call.1} parent=1 // pred_check
      _
    $region103: #{tpu_custom_call.1} parent=1 // pred_check_branch
      %1858 = sbr.rel (0) target = $region105
    $region104: #{tpu_custom_call.1} parent=1 // pred_region
      %s1860 = ssub.s32 256, 256
      %1861 = vsyncadd [#allocation3], %s1860
      %s1862 = sshll.u32 [#allocation2], 4
      %s1863 = int_to_ptr.vmem [resolvable:$true] %s1862
      %1868 = dma.vmem_to_hbm [thread:$0]  %s1863, 256, %s25, [#allocation3], 128, 128, 8
    $region105: #{tpu_custom_call.1} parent=1 // pred_fallthru
      _
    // Predicated region
    $region106: #{tpu_custom_call.1} parent=1 // pred_check
      _
    $region107: #{tpu_custom_call.1} parent=1 // pred_check_branch
      %1870 = sbr.rel (0) target = $region109
    $region108: #{tpu_custom_call.1} parent=1 // pred_region
      %1871 = dma.done [#allocation3], 256
    $region109: #{tpu_custom_call.1} parent=1 // pred_fallthru
      _
    %1872 = vsyncpa [#allocation3], 1

</llo_original>
